<compile_context>
chip_gen: v7x
topology: tpu7x:2x2x1
jax: 0.10.0
libtpu: 0.0.40
codegen_flags: <defaults>
</compile_context>

<pallas_src>
import functools

import jax
import jax.numpy as jnp
from jax.experimental import pallas as pl

FP = 128        # lane-dense padded feature width (multiple of 128)
BN_EPS = 1e-5   # PyTorch BatchNorm1d default eps

# Model dims (small, consistent with the module's constraints):
#   VAE_dims[0] == AE1_dims[-1] + AE2_dims[-1] + AE3_dims[-1]
#   NN_dims[0]  == VAE_dims[-1], len(NN_dims) == 4
AE1_dims = [24, 16]
AE2_dims = [20, 16]
AE3_dims = [28, 16]
VAE_dims = [48, 32, 16]
NN_dims = [16, 32, 24, 8]


# -----------------------------------------------------------------------------
# Fused kernel
# -----------------------------------------------------------------------------
def _firststage_kernel(x1, x2, x3, eps, w, b,
                       mean_o, logvar_o, r1_o, r2_o, r3_o, y_o,
                       *, num_classes):
    # w: [L, 128, 128] pre-transposed, BN-folded, offset-placed weights
    # b: [L, 1, 128]   matching biases
    def lin(h, l):
        return jnp.dot(h, w[l], preferred_element_type=jnp.float32) + b[l]

    relu = lambda v: jnp.maximum(v, 0.0)

    # --- three AE encoders (Linear+BN+ReLU). Their outputs are packed into
    #     disjoint column ranges, so torch.cat(..., dim=1) is just a sum.
    temp = relu(lin(x1[...], 0)) + relu(lin(x2[...], 1)) + relu(lin(x3[...], 2))

    # --- VAE encoder + mean / log_var heads (Linear+BN)
    h = relu(lin(temp, 3))
    mean = lin(h, 4)
    logvar = lin(h, 5)
    mean_o[...] = mean
    logvar_o[...] = logvar

    # --- reparameterization: z = mean + eps * exp(0.5 * log_var)
    #     (eps is zero in padded columns, so z stays zero there)
    z = mean + eps[...] * jnp.exp(0.5 * logvar)

    # --- VAE decoder (two Linear+BN+ReLU blocks)
    d = relu(lin(z, 6))
    recon = relu(lin(d, 7))

    # --- AE decoders (Linear+BN+Sigmoid). Row offsets in the packed weights
    #     implement torch.tensor_split of `recon` along the feature axis.
    r1_o[...] = jax.nn.sigmoid(lin(recon, 8))
    r2_o[...] = jax.nn.sigmoid(lin(recon, 9))
    r3_o[...] = jax.nn.sigmoid(lin(recon, 10))

    # --- classifier NeuralNetwork(mean): 2x (Linear+BN+ReLU) then Linear+Softmax
    n = relu(lin(mean, 11))
    n = relu(lin(n, 12))
    logits = lin(n, 13)
    # masked, numerically stable softmax over the valid class columns only
    col = jax.lax.broadcasted_iota(jnp.int32, logits.shape, 1)
    logits = jnp.where(col < num_classes, logits, -1e30)
    m = jnp.max(logits, axis=1, keepdims=True)
    e = jnp.exp(logits - m)
    y_o[...] = e / jnp.sum(e, axis=1, keepdims=True)


def firststage_forward(x1p, x2p, x3p, epsp, w_stack, b_stack, num_classes):
    """Whole FirstStage inference forward in one pallas_call.

    Inputs are already padded to [B, 128]; weights are packed [L, 128, 128].
    Outputs: (mean, log_var, recon_x1, recon_x2, recon_x3, y_pred), each
    [B, 128] padded (valid columns are sliced by the caller).
    """
    B = x1p.shape[0]
    out_shapes = tuple(jax.ShapeDtypeStruct((B, FP), jnp.float32) for _ in range(6))
    kernel = functools.partial(_firststage_kernel, num_classes=num_classes)
    # Gridless call: default BlockSpecs place each (lane-dense, 128-padded)
    # array wholly in VMEM. Total footprint ~1 MiB -> no vmem_limit override.
    return pl.pallas_call(kernel, out_shape=out_shapes)(
        x1p, x2p, x3p, epsp, w_stack, b_stack)


# -----------------------------------------------------------------------------
# Parameter init (deterministic), BN folding and weight packing
# -----------------------------------------------------------------------------
def _linear_init(key, fin, fout):
    kw, kb = jax.random.split(key)
    bound = 1.0 / (fin ** 0.5)
    W = jax.random.uniform(kw, (fout, fin), jnp.float32, -bound, bound)
    bv = jax.random.uniform(kb, (fout,), jnp.float32, -bound, bound)
    return W, bv


def _bn_init(key, f):
    k1, k2, k3, k4 = jax.random.split(key, 4)
    gamma = jax.random.uniform(k1, (f,), jnp.float32, 0.5, 1.5)
    beta = jax.random.uniform(k2, (f,), jnp.float32, -0.1, 0.1)
    rmean = jax.random.uniform(k3, (f,), jnp.float32, -0.1, 0.1)
    rvar = jax.random.uniform(k4, (f,), jnp.float32, 0.5, 1.5)
    return gamma, beta, rmean, rvar


def make_layer(key, fin, fout, with_bn=True):
    klin, kbn = jax.random.split(key)
    W, bv = _linear_init(klin, fin, fout)
    bn = _bn_init(kbn, fout) if with_bn else None
    return (W, bv, bn)


def _fold_bn(W, bv, bn):
    """Fold eval-mode BatchNorm1d into the preceding Linear."""
    if bn is None:
        return W, bv
    g, be, rm, rv = bn
    s = g / jnp.sqrt(rv + BN_EPS)
    return W * s[:, None], s * (bv - rm) + be


def _pack(layer, row_off=0, col_off=0):
    """BN-fold, pre-transpose to [fin, fout], zero-pad into a [FP, FP] slab."""
    W, bv, bn = layer
    Wf, bf = _fold_bn(W, bv, bn)
    fout, fin = Wf.shape
    wt = jnp.zeros((FP, FP), jnp.float32)
    wt = wt.at[row_off:row_off + fin, col_off:col_off + fout].set(Wf.T)
    bp = jnp.zeros((1, FP), jnp.float32)
    bp = bp.at[0, col_off:col_off + fout].set(bf)
    return wt, bp


def pack_params(params):
    d1, d2 = AE1_dims[-1], AE2_dims[-1]
    packed = [
        _pack(params["ae1_enc"], col_off=0),          # 0
        _pack(params["ae2_enc"], col_off=d1),         # 1
        _pack(params["ae3_enc"], col_off=d1 + d2),    # 2
        _pack(params["vae_enc"]),                     # 3
        _pack(params["mean"]),                        # 4
        _pack(params["logvar"]),                      # 5
        _pack(params["vae_dec0"]),                    # 6
        _pack(params["vae_dec1"]),                    # 7
        _pack(params["ae1_dec"], row_off=0),          # 8
        _pack(params["ae2_dec"], row_off=d1),         # 9
        _pack(params["ae3_dec"], row_off=d1 + d2),    # 10
        _pack(params["nn0"]),                         # 11
        _pack(params["nn1"]),                         # 12
        _pack(params["nn2"]),                         # 13
    ]
    w_stack = jnp.stack([p[0] for p in packed])
    b_stack = jnp.stack([p[1] for p in packed])
    return w_stack, b_stack


# -----------------------------------------------------------------------------
# Pure-JAX reference (mirrors the PyTorch module in eval mode)
# -----------------------------------------------------------------------------
def _bn_eval(x, bn):
    g, be, rm, rv = bn
    return (x - rm) / jnp.sqrt(rv + BN_EPS) * g + be


def _block(x, layer, act):
    W, bv, bn = layer
    h = x @ W.T + bv
    if bn is not None:
        h = _bn_eval(h, bn)
    if act == "relu":
        h = jnp.maximum(h, 0.0)
    elif act == "sigmoid":
        h = jax.nn.sigmoid(h)
    return h


def ref_forward(params, x1, x2, x3, eps):
    t1 = _block(x1, params["ae1_enc"], "relu")
    t2 = _block(x2, params["ae2_enc"], "relu")
    t3 = _block(x3, params["ae3_enc"], "relu")
    temp = jnp.concatenate([t1, t2, t3], axis=1)
    h = _block(temp, params["vae_enc"], "relu")
    mean = _block(h, params["mean"], "none")
    logvar = _block(h, params["logvar"], "none")
    z = mean + eps * jnp.exp(0.5 * logvar)
    d = _block(z, params["vae_dec0"], "relu")
    recon = _block(d, params["vae_dec1"], "relu")
    d1, d2 = AE1_dims[-1], AE2_dims[-1]
    z1, z2, z3 = recon[:, :d1], recon[:, d1:d1 + d2], recon[:, d1 + d2:]
    r1 = _block(z1, params["ae1_dec"], "sigmoid")
    r2 = _block(z2, params["ae2_dec"], "sigmoid")
    r3 = _block(z3, params["ae3_dec"], "sigmoid")
    n = _block(mean, params["nn0"], "relu")
    n = _block(n, params["nn1"], "relu")
    W, bv, _ = params["nn2"]
    y = jax.nn.softmax(n @ W.T + bv, axis=1)
    return mean, logvar, r1, r2, r3, y


# -----------------------------------------------------------------------------
if __name__ == "__main__":
    key = jax.random.PRNGKey(0)
    B = 8
    keys = jax.random.split(key, 18)

    params = {
        "ae1_enc": make_layer(keys[0], AE1_dims[0], AE1_dims[1]),
        "ae2_enc": make_layer(keys[1], AE2_dims[0], AE2_dims[1]),
        "ae3_enc": make_layer(keys[2], AE3_dims[0], AE3_dims[1]),
        "vae_enc": make_layer(keys[3], VAE_dims[0], VAE_dims[1]),
        "mean": make_layer(keys[4], VAE_dims[1], VAE_dims[2]),
        "logvar": make_layer(keys[5], VAE_dims[1], VAE_dims[2]),
        "vae_dec0": make_layer(keys[6], VAE_dims[2], VAE_dims[1]),
        "vae_dec1": make_layer(keys[7], VAE_dims[1], VAE_dims[0]),
        "ae1_dec": make_layer(keys[8], AE1_dims[1], AE1_dims[0]),
        "ae2_dec": make_layer(keys[9], AE2_dims[1], AE2_dims[0]),
        "ae3_dec": make_layer(keys[10], AE3_dims[1], AE3_dims[0]),
        "nn0": make_layer(keys[11], NN_dims[0], NN_dims[1]),
        "nn1": make_layer(keys[12], NN_dims[1], NN_dims[2]),
        "nn2": make_layer(keys[13], NN_dims[2], NN_dims[3], with_bn=False),
    }

    x1 = jax.random.normal(keys[14], (B, AE1_dims[0]), jnp.float32)
    x2 = jax.random.normal(keys[15], (B, AE2_dims[0]), jnp.float32)
    x3 = jax.random.normal(keys[16], (B, AE3_dims[0]), jnp.float32)
    # reparameterization noise generated host-side for determinism
    eps = jax.random.normal(keys[17], (B, VAE_dims[-1]), jnp.float32)

    w_stack, b_stack = pack_params(params)

    def pad_cols(a):
        return jnp.pad(a, ((0, 0), (0, FP - a.shape[1])))

    outs = firststage_forward(pad_cols(x1), pad_cols(x2), pad_cols(x3),
                              pad_cols(eps), w_stack, b_stack, NN_dims[-1])
    outs = jax.block_until_ready(outs)
    mean_p, logvar_p, r1_p, r2_p, r3_p, y_p = outs

    mean = mean_p[:, :VAE_dims[-1]]
    log_var = logvar_p[:, :VAE_dims[-1]]
    recon_x1 = r1_p[:, :AE1_dims[0]]
    recon_x2 = r2_p[:, :AE2_dims[0]]
    recon_x3 = r3_p[:, :AE3_dims[0]]
    y_pred = y_p[:, :NN_dims[-1]]

    ref = ref_forward(params, x1, x2, x3, eps)
    got = (mean, log_var, recon_x1, recon_x2, recon_x3, y_pred)
    for g, r in zip(got, ref):
        assert g.shape == r.shape, (g.shape, r.shape)
        assert jnp.allclose(g, r, atol=2e-2, rtol=2e-2), \
            float(jnp.max(jnp.abs(g - r)))

    print("KERNEL_OK")
</pallas_src>

<mosaic_0001>
module attributes {stable_mosaic.version = 11 : i64} {
  func.func @_firststage_kernel(%arg0: memref<8x128xf32, #tpu.memory_space<vmem>>, %arg1: memref<8x128xf32, #tpu.memory_space<vmem>>, %arg2: memref<8x128xf32, #tpu.memory_space<vmem>>, %arg3: memref<8x128xf32, #tpu.memory_space<vmem>>, %arg4: memref<14x128x128xf32, #tpu.memory_space<vmem>>, %arg5: memref<14x1x128xf32, #tpu.memory_space<vmem>>, %arg6: memref<8x128xf32, #tpu.memory_space<vmem>>, %arg7: memref<8x128xf32, #tpu.memory_space<vmem>>, %arg8: memref<8x128xf32, #tpu.memory_space<vmem>>, %arg9: memref<8x128xf32, #tpu.memory_space<vmem>>, %arg10: memref<8x128xf32, #tpu.memory_space<vmem>>, %arg11: memref<8x128xf32, #tpu.memory_space<vmem>>) attributes {dimension_semantics = [], scalar_prefetch = 0 : i64, scratch_operands = 0 : i64, tpu.core_type = #tpu.core_type<tc>} {
    %c0 = arith.constant 0 : index
    %c0_0 = arith.constant 0 : index
    %0 = vector.load %arg0[%c0, %c0_0] : memref<8x128xf32, #tpu.memory_space<vmem>>, vector<8x128xf32>
    %c0_1 = arith.constant 0 : index
    %c0_2 = arith.constant 0 : index
    %c0_3 = arith.constant 0 : index
    %1 = vector.load %arg4[%c0_1, %c0_2, %c0_3] : memref<14x128x128xf32, #tpu.memory_space<vmem>>, vector<1x128x128xf32>
    %2 = vector.shape_cast %1 : vector<1x128x128xf32> to vector<128x128xf32>
    %cst = arith.constant dense<0.000000e+00> : vector<8x128xf32>
    %3 = tpu.matmul %0, %2, %cst {dimension_numbers = #tpu.dot_dimension_numbers<[1], [0], [0], [1], [0, 0, 1, 1], [], []>} : vector<8x128xf32>, vector<128x128xf32>, vector<8x128xf32> -> vector<8x128xf32>
    %c0_4 = arith.constant 0 : index
    %c0_5 = arith.constant 0 : index
    %c0_6 = arith.constant 0 : index
    %4 = vector.load %arg5[%c0_4, %c0_5, %c0_6] : memref<14x1x128xf32, #tpu.memory_space<vmem>>, vector<1x1x128xf32>
    %5 = vector.shape_cast %4 : vector<1x1x128xf32> to vector<1x128xf32>
    %6 = vector.broadcast %5 : vector<1x128xf32> to vector<8x128xf32>
    %7 = arith.addf %3, %6 : vector<8x128xf32>
    %cst_7 = arith.constant 0.000000e+00 : f32
    %8 = vector.broadcast %cst_7 : f32 to vector<8x128xf32>
    %9 = arith.maximumf %7, %8 : vector<8x128xf32>
    %c0_8 = arith.constant 0 : index
    %c0_9 = arith.constant 0 : index
    %10 = vector.load %arg1[%c0_8, %c0_9] : memref<8x128xf32, #tpu.memory_space<vmem>>, vector<8x128xf32>
    %c1 = arith.constant 1 : index
    %c0_10 = arith.constant 0 : index
    %c0_11 = arith.constant 0 : index
    %11 = vector.load %arg4[%c1, %c0_10, %c0_11] : memref<14x128x128xf32, #tpu.memory_space<vmem>>, vector<1x128x128xf32>
    %12 = vector.shape_cast %11 : vector<1x128x128xf32> to vector<128x128xf32>
    %cst_12 = arith.constant dense<0.000000e+00> : vector<8x128xf32>
    %13 = tpu.matmul %10, %12, %cst_12 {dimension_numbers = #tpu.dot_dimension_numbers<[1], [0], [0], [1], [0, 0, 1, 1], [], []>} : vector<8x128xf32>, vector<128x128xf32>, vector<8x128xf32> -> vector<8x128xf32>
    %c1_13 = arith.constant 1 : index
    %c0_14 = arith.constant 0 : index
    %c0_15 = arith.constant 0 : index
    %14 = vector.load %arg5[%c1_13, %c0_14, %c0_15] : memref<14x1x128xf32, #tpu.memory_space<vmem>>, vector<1x1x128xf32>
    %15 = vector.shape_cast %14 : vector<1x1x128xf32> to vector<1x128xf32>
    %16 = vector.broadcast %15 : vector<1x128xf32> to vector<8x128xf32>
    %17 = arith.addf %13, %16 : vector<8x128xf32>
    %cst_16 = arith.constant 0.000000e+00 : f32
    %18 = vector.broadcast %cst_16 : f32 to vector<8x128xf32>
    %19 = arith.maximumf %17, %18 : vector<8x128xf32>
    %20 = arith.addf %9, %19 : vector<8x128xf32>
    %c0_17 = arith.constant 0 : index
    %c0_18 = arith.constant 0 : index
    %21 = vector.load %arg2[%c0_17, %c0_18] : memref<8x128xf32, #tpu.memory_space<vmem>>, vector<8x128xf32>
    %c2 = arith.constant 2 : index
    %c0_19 = arith.constant 0 : index
    %c0_20 = arith.constant 0 : index
    %22 = vector.load %arg4[%c2, %c0_19, %c0_20] : memref<14x128x128xf32, #tpu.memory_space<vmem>>, vector<1x128x128xf32>
    %23 = vector.shape_cast %22 : vector<1x128x128xf32> to vector<128x128xf32>
    %cst_21 = arith.constant dense<0.000000e+00> : vector<8x128xf32>
    %24 = tpu.matmul %21, %23, %cst_21 {dimension_numbers = #tpu.dot_dimension_numbers<[1], [0], [0], [1], [0, 0, 1, 1], [], []>} : vector<8x128xf32>, vector<128x128xf32>, vector<8x128xf32> -> vector<8x128xf32>
    %c2_22 = arith.constant 2 : index
    %c0_23 = arith.constant 0 : index
    %c0_24 = arith.constant 0 : index
    %25 = vector.load %arg5[%c2_22, %c0_23, %c0_24] : memref<14x1x128xf32, #tpu.memory_space<vmem>>, vector<1x1x128xf32>
    %26 = vector.shape_cast %25 : vector<1x1x128xf32> to vector<1x128xf32>
    %27 = vector.broadcast %26 : vector<1x128xf32> to vector<8x128xf32>
    %28 = arith.addf %24, %27 : vector<8x128xf32>
    %cst_25 = arith.constant 0.000000e+00 : f32
    %29 = vector.broadcast %cst_25 : f32 to vector<8x128xf32>
    %30 = arith.maximumf %28, %29 : vector<8x128xf32>
    %31 = arith.addf %20, %30 : vector<8x128xf32>
    %c3 = arith.constant 3 : index
    %c0_26 = arith.constant 0 : index
    %c0_27 = arith.constant 0 : index
    %32 = vector.load %arg4[%c3, %c0_26, %c0_27] : memref<14x128x128xf32, #tpu.memory_space<vmem>>, vector<1x128x128xf32>
    %33 = vector.shape_cast %32 : vector<1x128x128xf32> to vector<128x128xf32>
    %cst_28 = arith.constant dense<0.000000e+00> : vector<8x128xf32>
    %34 = tpu.matmul %31, %33, %cst_28 {dimension_numbers = #tpu.dot_dimension_numbers<[1], [0], [0], [1], [0, 0, 1, 1], [], []>} : vector<8x128xf32>, vector<128x128xf32>, vector<8x128xf32> -> vector<8x128xf32>
    %c3_29 = arith.constant 3 : index
    %c0_30 = arith.constant 0 : index
    %c0_31 = arith.constant 0 : index
    %35 = vector.load %arg5[%c3_29, %c0_30, %c0_31] : memref<14x1x128xf32, #tpu.memory_space<vmem>>, vector<1x1x128xf32>
    %36 = vector.shape_cast %35 : vector<1x1x128xf32> to vector<1x128xf32>
    %37 = vector.broadcast %36 : vector<1x128xf32> to vector<8x128xf32>
    %38 = arith.addf %34, %37 : vector<8x128xf32>
    %cst_32 = arith.constant 0.000000e+00 : f32
    %39 = vector.broadcast %cst_32 : f32 to vector<8x128xf32>
    %40 = arith.maximumf %38, %39 : vector<8x128xf32>
    %c4 = arith.constant 4 : index
    %c0_33 = arith.constant 0 : index
    %c0_34 = arith.constant 0 : index
    %41 = vector.load %arg4[%c4, %c0_33, %c0_34] : memref<14x128x128xf32, #tpu.memory_space<vmem>>, vector<1x128x128xf32>
    %42 = vector.shape_cast %41 : vector<1x128x128xf32> to vector<128x128xf32>
    %cst_35 = arith.constant dense<0.000000e+00> : vector<8x128xf32>
    %43 = tpu.matmul %40, %42, %cst_35 {dimension_numbers = #tpu.dot_dimension_numbers<[1], [0], [0], [1], [0, 0, 1, 1], [], []>} : vector<8x128xf32>, vector<128x128xf32>, vector<8x128xf32> -> vector<8x128xf32>
    %c4_36 = arith.constant 4 : index
    %c0_37 = arith.constant 0 : index
    %c0_38 = arith.constant 0 : index
    %44 = vector.load %arg5[%c4_36, %c0_37, %c0_38] : memref<14x1x128xf32, #tpu.memory_space<vmem>>, vector<1x1x128xf32>
    %45 = vector.shape_cast %44 : vector<1x1x128xf32> to vector<1x128xf32>
    %46 = vector.broadcast %45 : vector<1x128xf32> to vector<8x128xf32>
    %47 = arith.addf %43, %46 : vector<8x128xf32>
    %c5 = arith.constant 5 : index
    %c0_39 = arith.constant 0 : index
    %c0_40 = arith.constant 0 : index
    %48 = vector.load %arg4[%c5, %c0_39, %c0_40] : memref<14x128x128xf32, #tpu.memory_space<vmem>>, vector<1x128x128xf32>
    %49 = vector.shape_cast %48 : vector<1x128x128xf32> to vector<128x128xf32>
    %cst_41 = arith.constant dense<0.000000e+00> : vector<8x128xf32>
    %50 = tpu.matmul %40, %49, %cst_41 {dimension_numbers = #tpu.dot_dimension_numbers<[1], [0], [0], [1], [0, 0, 1, 1], [], []>} : vector<8x128xf32>, vector<128x128xf32>, vector<8x128xf32> -> vector<8x128xf32>
    %c5_42 = arith.constant 5 : index
    %c0_43 = arith.constant 0 : index
    %c0_44 = arith.constant 0 : index
    %51 = vector.load %arg5[%c5_42, %c0_43, %c0_44] : memref<14x1x128xf32, #tpu.memory_space<vmem>>, vector<1x1x128xf32>
    %52 = vector.shape_cast %51 : vector<1x1x128xf32> to vector<1x128xf32>
    %53 = vector.broadcast %52 : vector<1x128xf32> to vector<8x128xf32>
    %54 = arith.addf %50, %53 : vector<8x128xf32>
    %c0_45 = arith.constant 0 : index
    %c0_46 = arith.constant 0 : index
    %55 = vector.load %arg6[%c0_45, %c0_46] : memref<8x128xf32, #tpu.memory_space<vmem>>, vector<8x128xf32>
    tpu.vector_store %arg6[%c0_45, %c0_46], %47 {strides = array<i32>} : memref<8x128xf32, #tpu.memory_space<vmem>>, vector<8x128xf32>,
    %c0_47 = arith.constant 0 : index
    %c0_48 = arith.constant 0 : index
    %56 = vector.load %arg7[%c0_47, %c0_48] : memref<8x128xf32, #tpu.memory_space<vmem>>, vector<8x128xf32>
    tpu.vector_store %arg7[%c0_47, %c0_48], %54 {strides = array<i32>} : memref<8x128xf32, #tpu.memory_space<vmem>>, vector<8x128xf32>,
    %c0_49 = arith.constant 0 : index
    %c0_50 = arith.constant 0 : index
    %57 = vector.load %arg3[%c0_49, %c0_50] : memref<8x128xf32, #tpu.memory_space<vmem>>, vector<8x128xf32>
    %cst_51 = arith.constant 5.000000e-01 : f32
    %58 = vector.broadcast %cst_51 : f32 to vector<8x128xf32>
    %59 = arith.mulf %58, %54 : vector<8x128xf32>
    %60 = math.exp %59 : vector<8x128xf32>
    %61 = arith.mulf %57, %60 : vector<8x128xf32>
    %62 = arith.addf %47, %61 : vector<8x128xf32>
    %c6 = arith.constant 6 : index
    %c0_52 = arith.constant 0 : index
    %c0_53 = arith.constant 0 : index
    %63 = vector.load %arg4[%c6, %c0_52, %c0_53] : memref<14x128x128xf32, #tpu.memory_space<vmem>>, vector<1x128x128xf32>
    %64 = vector.shape_cast %63 : vector<1x128x128xf32> to vector<128x128xf32>
    %cst_54 = arith.constant dense<0.000000e+00> : vector<8x128xf32>
    %65 = tpu.matmul %62, %64, %cst_54 {dimension_numbers = #tpu.dot_dimension_numbers<[1], [0], [0], [1], [0, 0, 1, 1], [], []>} : vector<8x128xf32>, vector<128x128xf32>, vector<8x128xf32> -> vector<8x128xf32>
    %c6_55 = arith.constant 6 : index
    %c0_56 = arith.constant 0 : index
    %c0_57 = arith.constant 0 : index
    %66 = vector.load %arg5[%c6_55, %c0_56, %c0_57] : memref<14x1x128xf32, #tpu.memory_space<vmem>>, vector<1x1x128xf32>
    %67 = vector.shape_cast %66 : vector<1x1x128xf32> to vector<1x128xf32>
    %68 = vector.broadcast %67 : vector<1x128xf32> to vector<8x128xf32>
    %69 = arith.addf %65, %68 : vector<8x128xf32>
    %cst_58 = arith.constant 0.000000e+00 : f32
    %70 = vector.broadcast %cst_58 : f32 to vector<8x128xf32>
    %71 = arith.maximumf %69, %70 : vector<8x128xf32>
    %c7 = arith.constant 7 : index
    %c0_59 = arith.constant 0 : index
    %c0_60 = arith.constant 0 : index
    %72 = vector.load %arg4[%c7, %c0_59, %c0_60] : memref<14x128x128xf32, #tpu.memory_space<vmem>>, vector<1x128x128xf32>
    %73 = vector.shape_cast %72 : vector<1x128x128xf32> to vector<128x128xf32>
    %cst_61 = arith.constant dense<0.000000e+00> : vector<8x128xf32>
    %74 = tpu.matmul %71, %73, %cst_61 {dimension_numbers = #tpu.dot_dimension_numbers<[1], [0], [0], [1], [0, 0, 1, 1], [], []>} : vector<8x128xf32>, vector<128x128xf32>, vector<8x128xf32> -> vector<8x128xf32>
    %c7_62 = arith.constant 7 : index
    %c0_63 = arith.constant 0 : index
    %c0_64 = arith.constant 0 : index
    %75 = vector.load %arg5[%c7_62, %c0_63, %c0_64] : memref<14x1x128xf32, #tpu.memory_space<vmem>>, vector<1x1x128xf32>
    %76 = vector.shape_cast %75 : vector<1x1x128xf32> to vector<1x128xf32>
    %77 = vector.broadcast %76 : vector<1x128xf32> to vector<8x128xf32>
    %78 = arith.addf %74, %77 : vector<8x128xf32>
    %cst_65 = arith.constant 0.000000e+00 : f32
    %79 = vector.broadcast %cst_65 : f32 to vector<8x128xf32>
    %80 = arith.maximumf %78, %79 : vector<8x128xf32>
    %c8 = arith.constant 8 : index
    %c0_66 = arith.constant 0 : index
    %c0_67 = arith.constant 0 : index
    %81 = vector.load %arg4[%c8, %c0_66, %c0_67] : memref<14x128x128xf32, #tpu.memory_space<vmem>>, vector<1x128x128xf32>
    %82 = vector.shape_cast %81 : vector<1x128x128xf32> to vector<128x128xf32>
    %cst_68 = arith.constant dense<0.000000e+00> : vector<8x128xf32>
    %83 = tpu.matmul %80, %82, %cst_68 {dimension_numbers = #tpu.dot_dimension_numbers<[1], [0], [0], [1], [0, 0, 1, 1], [], []>} : vector<8x128xf32>, vector<128x128xf32>, vector<8x128xf32> -> vector<8x128xf32>
    %c8_69 = arith.constant 8 : index
    %c0_70 = arith.constant 0 : index
    %c0_71 = arith.constant 0 : index
    %84 = vector.load %arg5[%c8_69, %c0_70, %c0_71] : memref<14x1x128xf32, #tpu.memory_space<vmem>>, vector<1x1x128xf32>
    %85 = vector.shape_cast %84 : vector<1x1x128xf32> to vector<1x128xf32>
    %86 = vector.broadcast %85 : vector<1x128xf32> to vector<8x128xf32>
    %87 = arith.addf %83, %86 : vector<8x128xf32>
    %88 = arith.negf %87 : vector<8x128xf32>
    %89 = math.exp %88 : vector<8x128xf32>
    %cst_72 = arith.constant 1.000000e+00 : f32
    %90 = vector.broadcast %cst_72 : f32 to vector<8x128xf32>
    %91 = arith.addf %90, %89 : vector<8x128xf32>
    %92 = arith.divf %90, %91 : vector<8x128xf32>
    %c0_73 = arith.constant 0 : index
    %c0_74 = arith.constant 0 : index
    %93 = vector.load %arg8[%c0_73, %c0_74] : memref<8x128xf32, #tpu.memory_space<vmem>>, vector<8x128xf32>
    tpu.vector_store %arg8[%c0_73, %c0_74], %92 {strides = array<i32>} : memref<8x128xf32, #tpu.memory_space<vmem>>, vector<8x128xf32>,
    %c9 = arith.constant 9 : index
    %c0_75 = arith.constant 0 : index
    %c0_76 = arith.constant 0 : index
    %94 = vector.load %arg4[%c9, %c0_75, %c0_76] : memref<14x128x128xf32, #tpu.memory_space<vmem>>, vector<1x128x128xf32>
    %95 = vector.shape_cast %94 : vector<1x128x128xf32> to vector<128x128xf32>
    %cst_77 = arith.constant dense<0.000000e+00> : vector<8x128xf32>
    %96 = tpu.matmul %80, %95, %cst_77 {dimension_numbers = #tpu.dot_dimension_numbers<[1], [0], [0], [1], [0, 0, 1, 1], [], []>} : vector<8x128xf32>, vector<128x128xf32>, vector<8x128xf32> -> vector<8x128xf32>
    %c9_78 = arith.constant 9 : index
    %c0_79 = arith.constant 0 : index
    %c0_80 = arith.constant 0 : index
    %97 = vector.load %arg5[%c9_78, %c0_79, %c0_80] : memref<14x1x128xf32, #tpu.memory_space<vmem>>, vector<1x1x128xf32>
    %98 = vector.shape_cast %97 : vector<1x1x128xf32> to vector<1x128xf32>
    %99 = vector.broadcast %98 : vector<1x128xf32> to vector<8x128xf32>
    %100 = arith.addf %96, %99 : vector<8x128xf32>
    %101 = arith.negf %100 : vector<8x128xf32>
    %102 = math.exp %101 : vector<8x128xf32>
    %cst_81 = arith.constant 1.000000e+00 : f32
    %103 = vector.broadcast %cst_81 : f32 to vector<8x128xf32>
    %104 = arith.addf %103, %102 : vector<8x128xf32>
    %105 = arith.divf %103, %104 : vector<8x128xf32>
    %c0_82 = arith.constant 0 : index
    %c0_83 = arith.constant 0 : index
    %106 = vector.load %arg9[%c0_82, %c0_83] : memref<8x128xf32, #tpu.memory_space<vmem>>, vector<8x128xf32>
    tpu.vector_store %arg9[%c0_82, %c0_83], %105 {strides = array<i32>} : memref<8x128xf32, #tpu.memory_space<vmem>>, vector<8x128xf32>,
    %c10 = arith.constant 10 : index
    %c0_84 = arith.constant 0 : index
    %c0_85 = arith.constant 0 : index
    %107 = vector.load %arg4[%c10, %c0_84, %c0_85] : memref<14x128x128xf32, #tpu.memory_space<vmem>>, vector<1x128x128xf32>
    %108 = vector.shape_cast %107 : vector<1x128x128xf32> to vector<128x128xf32>
    %cst_86 = arith.constant dense<0.000000e+00> : vector<8x128xf32>
    %109 = tpu.matmul %80, %108, %cst_86 {dimension_numbers = #tpu.dot_dimension_numbers<[1], [0], [0], [1], [0, 0, 1, 1], [], []>} : vector<8x128xf32>, vector<128x128xf32>, vector<8x128xf32> -> vector<8x128xf32>
    %c10_87 = arith.constant 10 : index
    %c0_88 = arith.constant 0 : index
    %c0_89 = arith.constant 0 : index
    %110 = vector.load %arg5[%c10_87, %c0_88, %c0_89] : memref<14x1x128xf32, #tpu.memory_space<vmem>>, vector<1x1x128xf32>
    %111 = vector.shape_cast %110 : vector<1x1x128xf32> to vector<1x128xf32>
    %112 = vector.broadcast %111 : vector<1x128xf32> to vector<8x128xf32>
    %113 = arith.addf %109, %112 : vector<8x128xf32>
    %114 = arith.negf %113 : vector<8x128xf32>
    %115 = math.exp %114 : vector<8x128xf32>
    %cst_90 = arith.constant 1.000000e+00 : f32
    %116 = vector.broadcast %cst_90 : f32 to vector<8x128xf32>
    %117 = arith.addf %116, %115 : vector<8x128xf32>
    %118 = arith.divf %116, %117 : vector<8x128xf32>
    %c0_91 = arith.constant 0 : index
    %c0_92 = arith.constant 0 : index
    %119 = vector.load %arg10[%c0_91, %c0_92] : memref<8x128xf32, #tpu.memory_space<vmem>>, vector<8x128xf32>
    tpu.vector_store %arg10[%c0_91, %c0_92], %118 {strides = array<i32>} : memref<8x128xf32, #tpu.memory_space<vmem>>, vector<8x128xf32>,
    %c11 = arith.constant 11 : index
    %c0_93 = arith.constant 0 : index
    %c0_94 = arith.constant 0 : index
    %120 = vector.load %arg4[%c11, %c0_93, %c0_94] : memref<14x128x128xf32, #tpu.memory_space<vmem>>, vector<1x128x128xf32>
    %121 = vector.shape_cast %120 : vector<1x128x128xf32> to vector<128x128xf32>
    %cst_95 = arith.constant dense<0.000000e+00> : vector<8x128xf32>
    %122 = tpu.matmul %47, %121, %cst_95 {dimension_numbers = #tpu.dot_dimension_numbers<[1], [0], [0], [1], [0, 0, 1, 1], [], []>} : vector<8x128xf32>, vector<128x128xf32>, vector<8x128xf32> -> vector<8x128xf32>
    %c11_96 = arith.constant 11 : index
    %c0_97 = arith.constant 0 : index
    %c0_98 = arith.constant 0 : index
    %123 = vector.load %arg5[%c11_96, %c0_97, %c0_98] : memref<14x1x128xf32, #tpu.memory_space<vmem>>, vector<1x1x128xf32>
    %124 = vector.shape_cast %123 : vector<1x1x128xf32> to vector<1x128xf32>
    %125 = vector.broadcast %124 : vector<1x128xf32> to vector<8x128xf32>
    %126 = arith.addf %122, %125 : vector<8x128xf32>
    %cst_99 = arith.constant 0.000000e+00 : f32
    %127 = vector.broadcast %cst_99 : f32 to vector<8x128xf32>
    %128 = arith.maximumf %126, %127 : vector<8x128xf32>
    %c12 = arith.constant 12 : index
    %c0_100 = arith.constant 0 : index
    %c0_101 = arith.constant 0 : index
    %129 = vector.load %arg4[%c12, %c0_100, %c0_101] : memref<14x128x128xf32, #tpu.memory_space<vmem>>, vector<1x128x128xf32>
    %130 = vector.shape_cast %129 : vector<1x128x128xf32> to vector<128x128xf32>
    %cst_102 = arith.constant dense<0.000000e+00> : vector<8x128xf32>
    %131 = tpu.matmul %128, %130, %cst_102 {dimension_numbers = #tpu.dot_dimension_numbers<[1], [0], [0], [1], [0, 0, 1, 1], [], []>} : vector<8x128xf32>, vector<128x128xf32>, vector<8x128xf32> -> vector<8x128xf32>
    %c12_103 = arith.constant 12 : index
    %c0_104 = arith.constant 0 : index
    %c0_105 = arith.constant 0 : index
    %132 = vector.load %arg5[%c12_103, %c0_104, %c0_105] : memref<14x1x128xf32, #tpu.memory_space<vmem>>, vector<1x1x128xf32>
    %133 = vector.shape_cast %132 : vector<1x1x128xf32> to vector<1x128xf32>
    %134 = vector.broadcast %133 : vector<1x128xf32> to vector<8x128xf32>
    %135 = arith.addf %131, %134 : vector<8x128xf32>
    %cst_106 = arith.constant 0.000000e+00 : f32
    %136 = vector.broadcast %cst_106 : f32 to vector<8x128xf32>
    %137 = arith.maximumf %135, %136 : vector<8x128xf32>
    %c13 = arith.constant 13 : index
    %c0_107 = arith.constant 0 : index
    %c0_108 = arith.constant 0 : index
    %138 = vector.load %arg4[%c13, %c0_107, %c0_108] : memref<14x128x128xf32, #tpu.memory_space<vmem>>, vector<1x128x128xf32>
    %139 = vector.shape_cast %138 : vector<1x128x128xf32> to vector<128x128xf32>
    %cst_109 = arith.constant dense<0.000000e+00> : vector<8x128xf32>
    %140 = tpu.matmul %137, %139, %cst_109 {dimension_numbers = #tpu.dot_dimension_numbers<[1], [0], [0], [1], [0, 0, 1, 1], [], []>} : vector<8x128xf32>, vector<128x128xf32>, vector<8x128xf32> -> vector<8x128xf32>
    %c13_110 = arith.constant 13 : index
    %c0_111 = arith.constant 0 : index
    %c0_112 = arith.constant 0 : index
    %141 = vector.load %arg5[%c13_110, %c0_111, %c0_112] : memref<14x1x128xf32, #tpu.memory_space<vmem>>, vector<1x1x128xf32>
    %142 = vector.shape_cast %141 : vector<1x1x128xf32> to vector<1x128xf32>
    %143 = vector.broadcast %142 : vector<1x128xf32> to vector<8x128xf32>
    %144 = arith.addf %140, %143 : vector<8x128xf32>
    %145 = tpu.iota {dimensions = array<i32: 1>} : vector<8x128xi32>
    %c8_i32 = arith.constant 8 : i32
    %146 = vector.broadcast %c8_i32 : i32 to vector<8x128xi32>
    %147 = arith.cmpi slt, %145, %146 : vector<8x128xi32>
    %cst_113 = arith.constant -1.000000e+30 : f32
    %148 = vector.broadcast %cst_113 : f32 to vector<8x128xf32>
    %149 = arith.select %147, %144, %148 : vector<8x128xi1>, vector<8x128xf32>
    %cst_114 = arith.constant dense<0xFF800000> : vector<8xf32>
    %150 = vector.multi_reduction <maximumf>, %149, %cst_114 [1] : vector<8x128xf32> to vector<8xf32>
    %151 = vector.shape_cast %150 : vector<8xf32> to vector<8x1xf32>
    %152 = vector.broadcast %151 : vector<8x1xf32> to vector<8x128xf32>
    %153 = arith.subf %149, %152 : vector<8x128xf32>
    %154 = math.exp %153 : vector<8x128xf32>
    %cst_115 = arith.constant dense<0.000000e+00> : vector<8xf32>
    %155 = vector.multi_reduction <add>, %154, %cst_115 [1] : vector<8x128xf32> to vector<8xf32>
    %156 = vector.shape_cast %155 : vector<8xf32> to vector<8x1xf32>
    %157 = vector.broadcast %156 : vector<8x1xf32> to vector<8x128xf32>
    %158 = arith.divf %154, %157 : vector<8x128xf32>
    %c0_116 = arith.constant 0 : index
    %c0_117 = arith.constant 0 : index
    %159 = vector.load %arg11[%c0_116, %c0_117] : memref<8x128xf32, #tpu.memory_space<vmem>>, vector<8x128xf32>
    tpu.vector_store %arg11[%c0_116, %c0_117], %158 {strides = array<i32>} : memref<8x128xf32, #tpu.memory_space<vmem>>, vector<8x128xf32>,
    return
  }
}

</mosaic_0001>

<llo_original>
// kernel: tpu_custom_call.1
$region0: #{tpu_custom_call.1}
  #allocation0 [shape = 'u32[]', space=smem, size = 0x4, offset = 0x4, fixed_abs, tag = 'smem constant byte address 0x4 - core index']
  #allocation1 [shape = 'u32[144,128]{1,0:T(1,128)}', space=vmem, size = 0x12000, scoped, tag = 'internal scratch']
  %s0 = inlined_call_operand.hbm [shape: f32[8,128], index: 0, kind: input, shape index: {}]
  %s1 = inlined_call_operand.hbm [shape: f32[8,128], index: 1, kind: input, shape index: {}]
  %s2 = inlined_call_operand.hbm [shape: f32[8,128], index: 2, kind: input, shape index: {}]
  %s3 = inlined_call_operand.hbm [shape: f32[8,128], index: 3, kind: input, shape index: {}]
  %s4 = inlined_call_operand.hbm [shape: f32[14,128,128], index: 4, kind: input, shape index: {}]
  %s5 = inlined_call_operand.vmem [shape: f32[14,1,128], index: 5, kind: input, shape index: {}]
  %s6 = inlined_call_operand.hbm [shape: f32[8,128], index: 6, kind: output, shape index: {0}]
  %s7 = inlined_call_operand.hbm [shape: f32[8,128], index: 7, kind: output, shape index: {1}]
  %s8 = inlined_call_operand.hbm [shape: f32[8,128], index: 8, kind: output, shape index: {2}]
  %s9 = inlined_call_operand.hbm [shape: f32[8,128], index: 9, kind: output, shape index: {3}]
  %s10 = inlined_call_operand.hbm [shape: f32[8,128], index: 10, kind: output, shape index: {4}]
  %s11 = inlined_call_operand.hbm [shape: f32[8,128], index: 11, kind: output, shape index: {5}]
  %12 = xla_tuple %s6, %s7, %s8, %s9, %s10, %s11
  %s13 = sld [smem:[#allocation0]]
  $region94: #{tpu_custom_call.1} parent=0
    _
  %s15 = ssub.s32 1, %s13
  %s16 = scalar_select 0, %s15, %s13
  $region1: #{tpu_custom_call.1} parent=0
    #allocation2 [shape = 'u8[4096]{0}', space=vmem, size = 0x1000, scoped, tag = 'input window, operand 0, single buffered']
    #allocation3 [shape = 's32[1]{0}', space=sflag, size = 0x4, scoped, tag = 'scoped memory for tpu_custom_call.1']
    #allocation4 [shape = 's32[1]{0}', space=sflag, size = 0x4, scoped, tag = 'scoped memory for tpu_custom_call.1']
    #allocation5 [shape = 'u8[4096]{0}', space=vmem, size = 0x1000, scoped, tag = 'input window, operand 1, single buffered']
    #allocation6 [shape = 's32[1]{0}', space=sflag, size = 0x4, scoped, tag = 'scoped memory for tpu_custom_call.1']
    #allocation7 [shape = 'u8[4096]{0}', space=vmem, size = 0x1000, scoped, tag = 'input window, operand 2, single buffered']
    #allocation8 [shape = 'u8[4096]{0}', space=vmem, size = 0x1000, scoped, tag = 'input window, operand 3, single buffered']
    #allocation9 [shape = 's32[1]{0}', space=sflag, size = 0x4, scoped, tag = 'scoped memory for tpu_custom_call.1']
    #allocation10 [shape = 'u8[917504]{0}', space=vmem, size = 0xe0000, scoped, tag = 'input window, operand 4, single buffered']
    #allocation11 [shape = 'u8[4096]{0}', space=vmem, size = 0x1000, scoped, tag = 'output window, operand 0, single buffered']
    #allocation12 [shape = 'u8[4096]{0}', space=vmem, size = 0x1000, scoped, tag = 'output window, operand 1, single buffered']
    #allocation13 [shape = 's32[1]{0}', space=sflag, size = 0x4, scoped, tag = 'scoped memory for tpu_custom_call.1']
    #allocation14 [shape = 'u8[4096]{0}', space=vmem, size = 0x1000, scoped, tag = 'output window, operand 2, single buffered']
    #allocation15 [shape = 'u8[4096]{0}', space=vmem, size = 0x1000, scoped, tag = 'output window, operand 3, single buffered']
    #allocation16 [shape = 's32[1]{0}', space=sflag, size = 0x4, scoped, tag = 'scoped memory for tpu_custom_call.1']
    #allocation17 [shape = 'u8[4096]{0}', space=vmem, size = 0x1000, scoped, tag = 'output window, operand 4, single buffered']
    #allocation18 [shape = 'u8[4096]{0}', space=vmem, size = 0x1000, scoped, tag = 'output window, operand 5, single buffered']
    #allocation19 [shape = 's32[1]{0}', space=sflag, size = 0x4, scoped, tag = 'scoped memory for tpu_custom_call.1']
    %17 = vsyncpa [#allocation3], 0
    %18 = vsyncpa [#allocation6], 0
    %19 = vsyncpa [#allocation9], 0
    %20 = vsyncpa [#allocation4], 0
    %21 = vsyncpa [#allocation13], 0
    %22 = vsyncpa [#allocation16], 0
    %23 = vsyncpa [#allocation19], 0
    // Predicated region
    $region2: #{tpu_custom_call.1} parent=1 // pred_check
      _
    $region3: #{tpu_custom_call.1} parent=1 // pred_check_branch
      %25 = sbr.rel (0) target = $region5
    $region4: #{tpu_custom_call.1} parent=1 // pred_region
      %s27 = ssub.s32 128, 128
      %28 = vsyncadd [#allocation3], %s27
      %s30 = sshll.u32 [#allocation2], 4
      %s31 = int_to_ptr.vmem [resolvable:$true] %s30
      %33 = dma.hbm_to_vmem [thread:$0]  %s0, 128, %s31, [#allocation3]
    $region5: #{tpu_custom_call.1} parent=1 // pred_fallthru
      _
    // Predicated region
    $region6: #{tpu_custom_call.1} parent=1 // pred_check
      _
    $region7: #{tpu_custom_call.1} parent=1 // pred_check_branch
      %35 = sbr.rel (0) target = $region9
    $region8: #{tpu_custom_call.1} parent=1 // pred_region
      %s37 = ssub.s32 128, 128
      %38 = vsyncadd [#allocation6], %s37
      %s40 = sshll.u32 [#allocation5], 4
      %s41 = int_to_ptr.vmem [resolvable:$true] %s40
      %43 = dma.hbm_to_vmem [thread:$0]  %s1, 128, %s41, [#allocation6]
    $region9: #{tpu_custom_call.1} parent=1 // pred_fallthru
      _
    // Predicated region
    $region10: #{tpu_custom_call.1} parent=1 // pred_check
      _
    $region11: #{tpu_custom_call.1} parent=1 // pred_check_branch
      %45 = sbr.rel (0) target = $region13
    $region12: #{tpu_custom_call.1} parent=1 // pred_region
      %s47 = ssub.s32 128, 128
      %48 = vsyncadd [#allocation6], %s47
      %s50 = sshll.u32 [#allocation7], 4
      %s51 = int_to_ptr.vmem [resolvable:$true] %s50
      %53 = dma.hbm_to_vmem [thread:$0]  %s2, 128, %s51, [#allocation6]
    $region13: #{tpu_custom_call.1} parent=1 // pred_fallthru
      _
    // Predicated region
    $region14: #{tpu_custom_call.1} parent=1 // pred_check
      _
    $region15: #{tpu_custom_call.1} parent=1 // pred_check_branch
      %55 = sbr.rel (0) target = $region17
    $region16: #{tpu_custom_call.1} parent=1 // pred_region
      %s57 = ssub.s32 128, 128
      %58 = vsyncadd [#allocation9], %s57
      %s60 = sshll.u32 [#allocation8], 4
      %s61 = int_to_ptr.vmem [resolvable:$true] %s60
      %63 = dma.hbm_to_vmem [thread:$0]  %s3, 128, %s61, [#allocation9]
    $region17: #{tpu_custom_call.1} parent=1 // pred_fallthru
      _
    // Predicated region
    $region18: #{tpu_custom_call.1} parent=1 // pred_check
      _
    $region19: #{tpu_custom_call.1} parent=1 // pred_check_branch
      %65 = sbr.rel (0) target = $region21
    $region20: #{tpu_custom_call.1} parent=1 // pred_region
      %s67 = ssub.s32 28672, 28672
      %68 = vsyncadd [#allocation9], %s67
      %s69 = sshll.u32 [#allocation10], 4
      %s70 = int_to_ptr.vmem [resolvable:$true] %s69
      %75 = dma.hbm_to_vmem [thread:$0]  %s4, 28672, %s70, [#allocation9], 128, 128, 8
    $region21: #{tpu_custom_call.1} parent=1 // pred_fallthru
      _
    // Predicated region
    $region22: #{tpu_custom_call.1} parent=1 // pred_check
      _
    $region23: #{tpu_custom_call.1} parent=1 // pred_check_branch
      %77 = sbr.rel (0) target = $region25
    $region24: #{tpu_custom_call.1} parent=1 // pred_region
      _
    $region25: #{tpu_custom_call.1} parent=1 // pred_fallthru
      _
    // Predicated region
    $region26: #{tpu_custom_call.1} parent=1 // pred_check
      _
    $region27: #{tpu_custom_call.1} parent=1 // pred_check_branch
      %79 = sbr.rel (0) target = $region29
    $region28: #{tpu_custom_call.1} parent=1 // pred_region
      %80 = dma.done [#allocation3], 128
    $region29: #{tpu_custom_call.1} parent=1 // pred_fallthru
      _
    // Predicated region
    $region30: #{tpu_custom_call.1} parent=1 // pred_check
      _
    $region31: #{tpu_custom_call.1} parent=1 // pred_check_branch
      %82 = sbr.rel (0) target = $region33
    $region32: #{tpu_custom_call.1} parent=1 // pred_region
      %83 = dma.done [#allocation6], 128
    $region33: #{tpu_custom_call.1} parent=1 // pred_fallthru
      _
    // Predicated region
    $region34: #{tpu_custom_call.1} parent=1 // pred_check
      _
    $region35: #{tpu_custom_call.1} parent=1 // pred_check_branch
      %85 = sbr.rel (0) target = $region37
    $region36: #{tpu_custom_call.1} parent=1 // pred_region
      %86 = dma.done [#allocation6], 128
    $region37: #{tpu_custom_call.1} parent=1 // pred_fallthru
      _
    // Predicated region
    $region38: #{tpu_custom_call.1} parent=1 // pred_check
      _
    $region39: #{tpu_custom_call.1} parent=1 // pred_check_branch
      %88 = sbr.rel (0) target = $region41
    $region40: #{tpu_custom_call.1} parent=1 // pred_region
      %89 = dma.done [#allocation9], 128
    $region41: #{tpu_custom_call.1} parent=1 // pred_fallthru
      _
    // Predicated region
    $region42: #{tpu_custom_call.1} parent=1 // pred_check
      _
    $region43: #{tpu_custom_call.1} parent=1 // pred_check_branch
      %91 = sbr.rel (0) target = $region45
    $region44: #{tpu_custom_call.1} parent=1 // pred_region
      %92 = dma.done [#allocation9], 28672
    $region45: #{tpu_custom_call.1} parent=1 // pred_fallthru
      _
    %v93 = vld [vmem:[#allocation2] sm:$0xff]
    %v94 = vld [vmem:[#allocation10] sm:$0xff]
    %v95 = vld [vmem:[#allocation10 + $0x8] sm:$0xff]
    %v96 = vld [vmem:[#allocation10 + $0x10] sm:$0xff]
    %v97 = vld [vmem:[#allocation10 + $0x18] sm:$0xff]
    %v98 = vld [vmem:[#allocation10 + $0x20] sm:$0xff]
    %v99 = vld [vmem:[#allocation10 + $0x28] sm:$0xff]
    %v100 = vld [vmem:[#allocation10 + $0x30] sm:$0xff]
    %v101 = vld [vmem:[#allocation10 + $0x38] sm:$0xff]
    %v102 = vld [vmem:[#allocation10 + $0x40] sm:$0xff]
    %v103 = vld [vmem:[#allocation10 + $0x48] sm:$0xff]
    %v104 = vld [vmem:[#allocation10 + $0x50] sm:$0xff]
    %v105 = vld [vmem:[#allocation10 + $0x58] sm:$0xff]
    %v106 = vld [vmem:[#allocation10 + $0x60] sm:$0xff]
    %v107 = vld [vmem:[#allocation10 + $0x68] sm:$0xff]
    %v108 = vld [vmem:[#allocation10 + $0x70] sm:$0xff]
    %v109 = vld [vmem:[#allocation10 + $0x78] sm:$0xff]
    %v110 = vld [vmem:[%s5] sm:$0x1]
    %v112 = vlaneseq
    %v113 = vshrl.u32 %v112, 7
    %v114 = vsub.s32 0, %v113
    %v115 = vrot.slane %v110, %v114
    %117 = vmatprep.subr.mxu0 0.0
    %118 = vmatpush1.msra.mxu0 %v94
    %119 = vmatprep.subr.mxu0 0.0
    %120 = vmatpush1.msra.mxu0 %v95
    %121 = vmatprep.subr.mxu0 0.0
    %122 = vmatpush1.msra.mxu0 %v96
    %123 = vmatprep.subr.mxu0 0.0
    %124 = vmatpush1.msra.mxu0 %v97
    %125 = vmatprep.subr.mxu0 0.0
    %126 = vmatpush1.msra.mxu0 %v98
    %127 = vmatprep.subr.mxu0 0.0
    %128 = vmatpush1.msra.mxu0 %v99
    %129 = vmatprep.subr.mxu0 0.0
    %130 = vmatpush1.msra.mxu0 %v100
    %131 = vmatprep.subr.mxu0 0.0
    %132 = vmatpush1.msra.mxu0 %v101
    %133 = vmatprep.subr.mxu0 0.0
    %134 = vmatpush1.msra.mxu0 %v102
    %135 = vmatprep.subr.mxu0 0.0
    %136 = vmatpush1.msra.mxu0 %v103
    %137 = vmatprep.subr.mxu0 0.0
    %138 = vmatpush1.msra.mxu0 %v104
    %139 = vmatprep.subr.mxu0 0.0
    %140 = vmatpush1.msra.mxu0 %v105
    %141 = vmatprep.subr.mxu0 0.0
    %142 = vmatpush1.msra.mxu0 %v106
    %143 = vmatprep.subr.mxu0 0.0
    %144 = vmatpush1.msra.mxu0 %v107
    %145 = vmatprep.subr.mxu0 0.0
    %146 = vmatpush1.msra.mxu0 %v108
    %147 = vmatprep.subr.mxu0 0.0
    %148 = vmatpush1.msra.mxu0 %v109
    %149 = vmatprep.subr.mxu0 0.0
    %150 = vmatpush1.msra.mxu0 0.0
    %151 = vmatprep.subr.mxu0 0.0
    %152 = vmatpush1.msra.mxu0 0.0
    %153 = vmatprep.subr.mxu0 0.0
    %154 = vmatpush1.msra.mxu0 0.0
    %155 = vmatprep.subr.mxu0 0.0
    %156 = vmatpush1.msra.mxu0 0.0
    %157 = vmatprep.subr.mxu0 0.0
    %158 = vmatpush1.msra.mxu0 0.0
    %159 = vmatprep.subr.mxu0 0.0
    %160 = vmatpush1.msra.mxu0 0.0
    %161 = vmatprep.subr.mxu0 0.0
    %162 = vmatpush1.msra.mxu0 0.0
    %163 = vmatprep.subr.mxu0 0.0
    %164 = vmatpush1.msra.mxu0 0.0
    %165 = vmatprep.subr.mxu0 0.0
    %166 = vmatpush1.msra.mxu0 0.0
    %167 = vmatprep.subr.mxu0 0.0
    %168 = vmatpush1.msra.mxu0 0.0
    %169 = vmatprep.subr.mxu0 0.0
    %170 = vmatpush1.msra.mxu0 0.0
    %171 = vmatprep.subr.mxu0 0.0
    %172 = vmatpush1.msra.mxu0 0.0
    %173 = vmatprep.subr.mxu0 0.0
    %174 = vmatpush1.msra.mxu0 0.0
    %175 = vmatprep.subr.mxu0 0.0
    %176 = vmatpush1.msra.mxu0 0.0
    %177 = vmatprep.subr.mxu0 0.0
    %178 = vmatpush1.msra.mxu0 0.0
    %179 = vmatprep.subr.mxu0 0.0
    %180 = vmatpush1.msra.mxu0 0.0
    %181 = vmatprep.mubr.f32.mxu0 0.0
    %182 = vmatmul.mubr.f32.gmra.mrb[0].mxu0 %v93
    %v183 = vpop.f32.mrb[0].mxu0
    %v184 = vadd.f32 %v115, %v183
    %v185 = vpop.f32.mrb[0].mxu0
    %186 = vdwg.mxu0
    %v187 = vmax.f32 %v184, 0.0
    %v188 = vld [vmem:[#allocation5] sm:$0xff]
    %s189 = scalar_lea.vmem [#allocation10], 128
    %v190 = vld [vmem:[%s189] sm:$0xff]
    %v191 = vld [vmem:[%s189 + $0x8] sm:$0xff]
    %v192 = vld [vmem:[%s189 + $0x10] sm:$0xff]
    %v193 = vld [vmem:[%s189 + $0x18] sm:$0xff]
    %v194 = vld [vmem:[%s189 + $0x20] sm:$0xff]
    %v195 = vld [vmem:[%s189 + $0x28] sm:$0xff]
    %v196 = vld [vmem:[%s189 + $0x30] sm:$0xff]
    %v197 = vld [vmem:[%s189 + $0x38] sm:$0xff]
    %v198 = vld [vmem:[%s189 + $0x40] sm:$0xff]
    %v199 = vld [vmem:[%s189 + $0x48] sm:$0xff]
    %v200 = vld [vmem:[%s189 + $0x50] sm:$0xff]
    %v201 = vld [vmem:[%s189 + $0x58] sm:$0xff]
    %v202 = vld [vmem:[%s189 + $0x60] sm:$0xff]
    %v203 = vld [vmem:[%s189 + $0x68] sm:$0xff]
    %v204 = vld [vmem:[%s189 + $0x70] sm:$0xff]
    %v205 = vld [vmem:[%s189 + $0x78] sm:$0xff]
    %s206 = scalar_lea.vmem %s5, 1
    %v207 = vld [vmem:[%s206] sm:$0x1]
    %v209 = vlaneseq
    %v210 = vshrl.u32 %v209, 7
    %v211 = vsub.s32 0, %v210
    %v212 = vrot.slane %v207, %v211
    %214 = vmatprep.subr.mxu0 0.0
    %215 = vmatpush1.msra.mxu0 %v190
    %216 = vmatprep.subr.mxu0 0.0
    %217 = vmatpush1.msra.mxu0 %v191
    %218 = vmatprep.subr.mxu0 0.0
    %219 = vmatpush1.msra.mxu0 %v192
    %220 = vmatprep.subr.mxu0 0.0
    %221 = vmatpush1.msra.mxu0 %v193
    %222 = vmatprep.subr.mxu0 0.0
    %223 = vmatpush1.msra.mxu0 %v194
    %224 = vmatprep.subr.mxu0 0.0
    %225 = vmatpush1.msra.mxu0 %v195
    %226 = vmatprep.subr.mxu0 0.0
    %227 = vmatpush1.msra.mxu0 %v196
    %228 = vmatprep.subr.mxu0 0.0
    %229 = vmatpush1.msra.mxu0 %v197
    %230 = vmatprep.subr.mxu0 0.0
    %231 = vmatpush1.msra.mxu0 %v198
    %232 = vmatprep.subr.mxu0 0.0
    %233 = vmatpush1.msra.mxu0 %v199
    %234 = vmatprep.subr.mxu0 0.0
    %235 = vmatpush1.msra.mxu0 %v200
    %236 = vmatprep.subr.mxu0 0.0
    %237 = vmatpush1.msra.mxu0 %v201
    %238 = vmatprep.subr.mxu0 0.0
    %239 = vmatpush1.msra.mxu0 %v202
    %240 = vmatprep.subr.mxu0 0.0
    %241 = vmatpush1.msra.mxu0 %v203
    %242 = vmatprep.subr.mxu0 0.0
    %243 = vmatpush1.msra.mxu0 %v204
    %244 = vmatprep.subr.mxu0 0.0
    %245 = vmatpush1.msra.mxu0 %v205
    %246 = vmatprep.subr.mxu0 0.0
    %247 = vmatpush1.msra.mxu0 0.0
    %248 = vmatprep.subr.mxu0 0.0
    %249 = vmatpush1.msra.mxu0 0.0
    %250 = vmatprep.subr.mxu0 0.0
    %251 = vmatpush1.msra.mxu0 0.0
    %252 = vmatprep.subr.mxu0 0.0
    %253 = vmatpush1.msra.mxu0 0.0
    %254 = vmatprep.subr.mxu0 0.0
    %255 = vmatpush1.msra.mxu0 0.0
    %256 = vmatprep.subr.mxu0 0.0
    %257 = vmatpush1.msra.mxu0 0.0
    %258 = vmatprep.subr.mxu0 0.0
    %259 = vmatpush1.msra.mxu0 0.0
    %260 = vmatprep.subr.mxu0 0.0
    %261 = vmatpush1.msra.mxu0 0.0
    %262 = vmatprep.subr.mxu0 0.0
    %263 = vmatpush1.msra.mxu0 0.0
    %264 = vmatprep.subr.mxu0 0.0
    %265 = vmatpush1.msra.mxu0 0.0
    %266 = vmatprep.subr.mxu0 0.0
    %267 = vmatpush1.msra.mxu0 0.0
    %268 = vmatprep.subr.mxu0 0.0
    %269 = vmatpush1.msra.mxu0 0.0
    %270 = vmatprep.subr.mxu0 0.0
    %271 = vmatpush1.msra.mxu0 0.0
    %272 = vmatprep.subr.mxu0 0.0
    %273 = vmatpush1.msra.mxu0 0.0
    %274 = vmatprep.subr.mxu0 0.0
    %275 = vmatpush1.msra.mxu0 0.0
    %276 = vmatprep.subr.mxu0 0.0
    %277 = vmatpush1.msra.mxu0 0.0
    %278 = vmatprep.mubr.f32.mxu0 0.0
    %279 = vmatmul.mubr.f32.gmra.mrb[0].mxu0 %v188
    %v280 = vpop.f32.mrb[0].mxu0
    %v281 = vadd.f32 %v212, %v280
    %v282 = vpop.f32.mrb[0].mxu0
    %283 = vdwg.mxu0
    %v284 = vmax.f32 %v281, 0.0
    %v285 = vadd.f32 %v187, %v284
    %v286 = vld [vmem:[#allocation7] sm:$0xff]
    %s287 = scalar_lea.vmem [#allocation10], 256
    %v288 = vld [vmem:[%s287] sm:$0xff]
    %v289 = vld [vmem:[%s287 + $0x8] sm:$0xff]
    %v290 = vld [vmem:[%s287 + $0x10] sm:$0xff]
    %v291 = vld [vmem:[%s287 + $0x18] sm:$0xff]
    %v292 = vld [vmem:[%s287 + $0x20] sm:$0xff]
    %v293 = vld [vmem:[%s287 + $0x28] sm:$0xff]
    %v294 = vld [vmem:[%s287 + $0x30] sm:$0xff]
    %v295 = vld [vmem:[%s287 + $0x38] sm:$0xff]
    %v296 = vld [vmem:[%s287 + $0x40] sm:$0xff]
    %v297 = vld [vmem:[%s287 + $0x48] sm:$0xff]
    %v298 = vld [vmem:[%s287 + $0x50] sm:$0xff]
    %v299 = vld [vmem:[%s287 + $0x58] sm:$0xff]
    %v300 = vld [vmem:[%s287 + $0x60] sm:$0xff]
    %v301 = vld [vmem:[%s287 + $0x68] sm:$0xff]
    %v302 = vld [vmem:[%s287 + $0x70] sm:$0xff]
    %v303 = vld [vmem:[%s287 + $0x78] sm:$0xff]
    %s304 = scalar_lea.vmem %s5, 2
    %v305 = vld [vmem:[%s304] sm:$0x1]
    %v307 = vlaneseq
    %v308 = vshrl.u32 %v307, 7
    %v309 = vsub.s32 0, %v308
    %v310 = vrot.slane %v305, %v309
    %312 = vmatprep.subr.mxu0 0.0
    %313 = vmatpush1.msra.mxu0 %v288
    %314 = vmatprep.subr.mxu0 0.0
    %315 = vmatpush1.msra.mxu0 %v289
    %316 = vmatprep.subr.mxu0 0.0
    %317 = vmatpush1.msra.mxu0 %v290
    %318 = vmatprep.subr.mxu0 0.0
    %319 = vmatpush1.msra.mxu0 %v291
    %320 = vmatprep.subr.mxu0 0.0
    %321 = vmatpush1.msra.mxu0 %v292
    %322 = vmatprep.subr.mxu0 0.0
    %323 = vmatpush1.msra.mxu0 %v293
    %324 = vmatprep.subr.mxu0 0.0
    %325 = vmatpush1.msra.mxu0 %v294
    %326 = vmatprep.subr.mxu0 0.0
    %327 = vmatpush1.msra.mxu0 %v295
    %328 = vmatprep.subr.mxu0 0.0
    %329 = vmatpush1.msra.mxu0 %v296
    %330 = vmatprep.subr.mxu0 0.0
    %331 = vmatpush1.msra.mxu0 %v297
    %332 = vmatprep.subr.mxu0 0.0
    %333 = vmatpush1.msra.mxu0 %v298
    %334 = vmatprep.subr.mxu0 0.0
    %335 = vmatpush1.msra.mxu0 %v299
    %336 = vmatprep.subr.mxu0 0.0
    %337 = vmatpush1.msra.mxu0 %v300
    %338 = vmatprep.subr.mxu0 0.0
    %339 = vmatpush1.msra.mxu0 %v301
    %340 = vmatprep.subr.mxu0 0.0
    %341 = vmatpush1.msra.mxu0 %v302
    %342 = vmatprep.subr.mxu0 0.0
    %343 = vmatpush1.msra.mxu0 %v303
    %344 = vmatprep.subr.mxu0 0.0
    %345 = vmatpush1.msra.mxu0 0.0
    %346 = vmatprep.subr.mxu0 0.0
    %347 = vmatpush1.msra.mxu0 0.0
    %348 = vmatprep.subr.mxu0 0.0
    %349 = vmatpush1.msra.mxu0 0.0
    %350 = vmatprep.subr.mxu0 0.0
    %351 = vmatpush1.msra.mxu0 0.0
    %352 = vmatprep.subr.mxu0 0.0
    %353 = vmatpush1.msra.mxu0 0.0
    %354 = vmatprep.subr.mxu0 0.0
    %355 = vmatpush1.msra.mxu0 0.0
    %356 = vmatprep.subr.mxu0 0.0
    %357 = vmatpush1.msra.mxu0 0.0
    %358 = vmatprep.subr.mxu0 0.0
    %359 = vmatpush1.msra.mxu0 0.0
    %360 = vmatprep.subr.mxu0 0.0
    %361 = vmatpush1.msra.mxu0 0.0
    %362 = vmatprep.subr.mxu0 0.0
    %363 = vmatpush1.msra.mxu0 0.0
    %364 = vmatprep.subr.mxu0 0.0
    %365 = vmatpush1.msra.mxu0 0.0
    %366 = vmatprep.subr.mxu0 0.0
    %367 = vmatpush1.msra.mxu0 0.0
    %368 = vmatprep.subr.mxu0 0.0
    %369 = vmatpush1.msra.mxu0 0.0
    %370 = vmatprep.subr.mxu0 0.0
    %371 = vmatpush1.msra.mxu0 0.0
    %372 = vmatprep.subr.mxu0 0.0
    %373 = vmatpush1.msra.mxu0 0.0
    %374 = vmatprep.subr.mxu0 0.0
    %375 = vmatpush1.msra.mxu0 0.0
    %376 = vmatprep.mubr.f32.mxu0 0.0
    %377 = vmatmul.mubr.f32.gmra.mrb[0].mxu0 %v286
    %v378 = vpop.f32.mrb[0].mxu0
    %v379 = vadd.f32 %v310, %v378
    %v380 = vpop.f32.mrb[0].mxu0
    %381 = vdwg.mxu0
    %v382 = vmax.f32 %v379, 0.0
    %v383 = vadd.f32 %v285, %v382
    %s384 = scalar_lea.vmem [#allocation10], 384
    %v385 = vld [vmem:[%s384] sm:$0xff]
    %v386 = vld [vmem:[%s384 + $0x8] sm:$0xff]
    %v387 = vld [vmem:[%s384 + $0x10] sm:$0xff]
    %v388 = vld [vmem:[%s384 + $0x18] sm:$0xff]
    %v389 = vld [vmem:[%s384 + $0x20] sm:$0xff]
    %v390 = vld [vmem:[%s384 + $0x28] sm:$0xff]
    %v391 = vld [vmem:[%s384 + $0x30] sm:$0xff]
    %v392 = vld [vmem:[%s384 + $0x38] sm:$0xff]
    %v393 = vld [vmem:[%s384 + $0x40] sm:$0xff]
    %v394 = vld [vmem:[%s384 + $0x48] sm:$0xff]
    %v395 = vld [vmem:[%s384 + $0x50] sm:$0xff]
    %v396 = vld [vmem:[%s384 + $0x58] sm:$0xff]
    %v397 = vld [vmem:[%s384 + $0x60] sm:$0xff]
    %v398 = vld [vmem:[%s384 + $0x68] sm:$0xff]
    %v399 = vld [vmem:[%s384 + $0x70] sm:$0xff]
    %v400 = vld [vmem:[%s384 + $0x78] sm:$0xff]
    %s401 = scalar_lea.vmem %s5, 3
    %v402 = vld [vmem:[%s401] sm:$0x1]
    %v404 = vlaneseq
    %v405 = vshrl.u32 %v404, 7
    %v406 = vsub.s32 0, %v405
    %v407 = vrot.slane %v402, %v406
    %409 = vmatprep.subr.mxu0 0.0
    %410 = vmatpush1.msra.mxu0 %v385
    %411 = vmatprep.subr.mxu0 0.0
    %412 = vmatpush1.msra.mxu0 %v386
    %413 = vmatprep.subr.mxu0 0.0
    %414 = vmatpush1.msra.mxu0 %v387
    %415 = vmatprep.subr.mxu0 0.0
    %416 = vmatpush1.msra.mxu0 %v388
    %417 = vmatprep.subr.mxu0 0.0
    %418 = vmatpush1.msra.mxu0 %v389
    %419 = vmatprep.subr.mxu0 0.0
    %420 = vmatpush1.msra.mxu0 %v390
    %421 = vmatprep.subr.mxu0 0.0
    %422 = vmatpush1.msra.mxu0 %v391
    %423 = vmatprep.subr.mxu0 0.0
    %424 = vmatpush1.msra.mxu0 %v392
    %425 = vmatprep.subr.mxu0 0.0
    %426 = vmatpush1.msra.mxu0 %v393
    %427 = vmatprep.subr.mxu0 0.0
    %428 = vmatpush1.msra.mxu0 %v394
    %429 = vmatprep.subr.mxu0 0.0
    %430 = vmatpush1.msra.mxu0 %v395
    %431 = vmatprep.subr.mxu0 0.0
    %432 = vmatpush1.msra.mxu0 %v396
    %433 = vmatprep.subr.mxu0 0.0
    %434 = vmatpush1.msra.mxu0 %v397
    %435 = vmatprep.subr.mxu0 0.0
    %436 = vmatpush1.msra.mxu0 %v398
    %437 = vmatprep.subr.mxu0 0.0
    %438 = vmatpush1.msra.mxu0 %v399
    %439 = vmatprep.subr.mxu0 0.0
    %440 = vmatpush1.msra.mxu0 %v400
    %441 = vmatprep.subr.mxu0 0.0
    %442 = vmatpush1.msra.mxu0 0.0
    %443 = vmatprep.subr.mxu0 0.0
    %444 = vmatpush1.msra.mxu0 0.0
    %445 = vmatprep.subr.mxu0 0.0
    %446 = vmatpush1.msra.mxu0 0.0
    %447 = vmatprep.subr.mxu0 0.0
    %448 = vmatpush1.msra.mxu0 0.0
    %449 = vmatprep.subr.mxu0 0.0
    %450 = vmatpush1.msra.mxu0 0.0
    %451 = vmatprep.subr.mxu0 0.0
    %452 = vmatpush1.msra.mxu0 0.0
    %453 = vmatprep.subr.mxu0 0.0
    %454 = vmatpush1.msra.mxu0 0.0
    %455 = vmatprep.subr.mxu0 0.0
    %456 = vmatpush1.msra.mxu0 0.0
    %457 = vmatprep.subr.mxu0 0.0
    %458 = vmatpush1.msra.mxu0 0.0
    %459 = vmatprep.subr.mxu0 0.0
    %460 = vmatpush1.msra.mxu0 0.0
    %461 = vmatprep.subr.mxu0 0.0
    %462 = vmatpush1.msra.mxu0 0.0
    %463 = vmatprep.subr.mxu0 0.0
    %464 = vmatpush1.msra.mxu0 0.0
    %465 = vmatprep.subr.mxu0 0.0
    %466 = vmatpush1.msra.mxu0 0.0
    %467 = vmatprep.subr.mxu0 0.0
    %468 = vmatpush1.msra.mxu0 0.0
    %469 = vmatprep.subr.mxu0 0.0
    %470 = vmatpush1.msra.mxu0 0.0
    %471 = vmatprep.subr.mxu0 0.0
    %472 = vmatpush1.msra.mxu0 0.0
    %473 = vmatprep.mubr.f32.mxu0 0.0
    %474 = vmatmul.mubr.f32.gmra.mrb[0].mxu0 %v383
    %v475 = vpop.f32.mrb[0].mxu0
    %v476 = vadd.f32 %v407, %v475
    %v477 = vpop.f32.mrb[0].mxu0
    %478 = vdwg.mxu0
    %v479 = vmax.f32 %v476, 0.0
    %s480 = scalar_lea.vmem [#allocation10], 512
    %v481 = vld [vmem:[%s480] sm:$0xff]
    %v482 = vld [vmem:[%s480 + $0x8] sm:$0xff]
    %v483 = vld [vmem:[%s480 + $0x10] sm:$0xff]
    %v484 = vld [vmem:[%s480 + $0x18] sm:$0xff]
    %v485 = vld [vmem:[%s480 + $0x20] sm:$0xff]
    %v486 = vld [vmem:[%s480 + $0x28] sm:$0xff]
    %v487 = vld [vmem:[%s480 + $0x30] sm:$0xff]
    %v488 = vld [vmem:[%s480 + $0x38] sm:$0xff]
    %v489 = vld [vmem:[%s480 + $0x40] sm:$0xff]
    %v490 = vld [vmem:[%s480 + $0x48] sm:$0xff]
    %v491 = vld [vmem:[%s480 + $0x50] sm:$0xff]
    %v492 = vld [vmem:[%s480 + $0x58] sm:$0xff]
    %v493 = vld [vmem:[%s480 + $0x60] sm:$0xff]
    %v494 = vld [vmem:[%s480 + $0x68] sm:$0xff]
    %v495 = vld [vmem:[%s480 + $0x70] sm:$0xff]
    %v496 = vld [vmem:[%s480 + $0x78] sm:$0xff]
    %s497 = scalar_lea.vmem %s5, 4
    %v498 = vld [vmem:[%s497] sm:$0x1]
    %v500 = vlaneseq
    %v501 = vshrl.u32 %v500, 7
    %v502 = vsub.s32 0, %v501
    %v503 = vrot.slane %v498, %v502
    %505 = vmatprep.subr.mxu0 0.0
    %506 = vmatpush1.msra.mxu0 %v481
    %507 = vmatprep.subr.mxu0 0.0
    %508 = vmatpush1.msra.mxu0 %v482
    %509 = vmatprep.subr.mxu0 0.0
    %510 = vmatpush1.msra.mxu0 %v483
    %511 = vmatprep.subr.mxu0 0.0
    %512 = vmatpush1.msra.mxu0 %v484
    %513 = vmatprep.subr.mxu0 0.0
    %514 = vmatpush1.msra.mxu0 %v485
    %515 = vmatprep.subr.mxu0 0.0
    %516 = vmatpush1.msra.mxu0 %v486
    %517 = vmatprep.subr.mxu0 0.0
    %518 = vmatpush1.msra.mxu0 %v487
    %519 = vmatprep.subr.mxu0 0.0
    %520 = vmatpush1.msra.mxu0 %v488
    %521 = vmatprep.subr.mxu0 0.0
    %522 = vmatpush1.msra.mxu0 %v489
    %523 = vmatprep.subr.mxu0 0.0
    %524 = vmatpush1.msra.mxu0 %v490
    %525 = vmatprep.subr.mxu0 0.0
    %526 = vmatpush1.msra.mxu0 %v491
    %527 = vmatprep.subr.mxu0 0.0
    %528 = vmatpush1.msra.mxu0 %v492
    %529 = vmatprep.subr.mxu0 0.0
    %530 = vmatpush1.msra.mxu0 %v493
    %531 = vmatprep.subr.mxu0 0.0
    %532 = vmatpush1.msra.mxu0 %v494
    %533 = vmatprep.subr.mxu0 0.0
    %534 = vmatpush1.msra.mxu0 %v495
    %535 = vmatprep.subr.mxu0 0.0
    %536 = vmatpush1.msra.mxu0 %v496
    %537 = vmatprep.subr.mxu0 0.0
    %538 = vmatpush1.msra.mxu0 0.0
    %539 = vmatprep.subr.mxu0 0.0
    %540 = vmatpush1.msra.mxu0 0.0
    %541 = vmatprep.subr.mxu0 0.0
    %542 = vmatpush1.msra.mxu0 0.0
    %543 = vmatprep.subr.mxu0 0.0
    %544 = vmatpush1.msra.mxu0 0.0
    %545 = vmatprep.subr.mxu0 0.0
    %546 = vmatpush1.msra.mxu0 0.0
    %547 = vmatprep.subr.mxu0 0.0
    %548 = vmatpush1.msra.mxu0 0.0
    %549 = vmatprep.subr.mxu0 0.0
    %550 = vmatpush1.msra.mxu0 0.0
    %551 = vmatprep.subr.mxu0 0.0
    %552 = vmatpush1.msra.mxu0 0.0
    %553 = vmatprep.subr.mxu0 0.0
    %554 = vmatpush1.msra.mxu0 0.0
    %555 = vmatprep.subr.mxu0 0.0
    %556 = vmatpush1.msra.mxu0 0.0
    %557 = vmatprep.subr.mxu0 0.0
    %558 = vmatpush1.msra.mxu0 0.0
    %559 = vmatprep.subr.mxu0 0.0
    %560 = vmatpush1.msra.mxu0 0.0
    %561 = vmatprep.subr.mxu0 0.0
    %562 = vmatpush1.msra.mxu0 0.0
    %563 = vmatprep.subr.mxu0 0.0
    %564 = vmatpush1.msra.mxu0 0.0
    %565 = vmatprep.subr.mxu0 0.0
    %566 = vmatpush1.msra.mxu0 0.0
    %567 = vmatprep.subr.mxu0 0.0
    %568 = vmatpush1.msra.mxu0 0.0
    %569 = vmatprep.mubr.f32.mxu0 0.0
    %570 = vmatmul.mubr.f32.gmra.mrb[0].mxu0 %v479
    %v571 = vpop.f32.mrb[0].mxu0
    %v572 = vadd.f32 %v503, %v571
    %v573 = vpop.f32.mrb[0].mxu0
    %574 = vdwg.mxu0
    %s575 = scalar_lea.vmem [#allocation10], 640
    %v576 = vld [vmem:[%s575] sm:$0xff]
    %v577 = vld [vmem:[%s575 + $0x8] sm:$0xff]
    %v578 = vld [vmem:[%s575 + $0x10] sm:$0xff]
    %v579 = vld [vmem:[%s575 + $0x18] sm:$0xff]
    %v580 = vld [vmem:[%s575 + $0x20] sm:$0xff]
    %v581 = vld [vmem:[%s575 + $0x28] sm:$0xff]
    %v582 = vld [vmem:[%s575 + $0x30] sm:$0xff]
    %v583 = vld [vmem:[%s575 + $0x38] sm:$0xff]
    %v584 = vld [vmem:[%s575 + $0x40] sm:$0xff]
    %v585 = vld [vmem:[%s575 + $0x48] sm:$0xff]
    %v586 = vld [vmem:[%s575 + $0x50] sm:$0xff]
    %v587 = vld [vmem:[%s575 + $0x58] sm:$0xff]
    %v588 = vld [vmem:[%s575 + $0x60] sm:$0xff]
    %v589 = vld [vmem:[%s575 + $0x68] sm:$0xff]
    %v590 = vld [vmem:[%s575 + $0x70] sm:$0xff]
    %v591 = vld [vmem:[%s575 + $0x78] sm:$0xff]
    %s592 = scalar_lea.vmem %s5, 5
    %v593 = vld [vmem:[%s592] sm:$0x1]
    %v595 = vlaneseq
    %v596 = vshrl.u32 %v595, 7
    %v597 = vsub.s32 0, %v596
    %v598 = vrot.slane %v593, %v597
    %600 = vmatprep.subr.mxu0 0.0
    %601 = vmatpush1.msra.mxu0 %v576
    %602 = vmatprep.subr.mxu0 0.0
    %603 = vmatpush1.msra.mxu0 %v577
    %604 = vmatprep.subr.mxu0 0.0
    %605 = vmatpush1.msra.mxu0 %v578
    %606 = vmatprep.subr.mxu0 0.0
    %607 = vmatpush1.msra.mxu0 %v579
    %608 = vmatprep.subr.mxu0 0.0
    %609 = vmatpush1.msra.mxu0 %v580
    %610 = vmatprep.subr.mxu0 0.0
    %611 = vmatpush1.msra.mxu0 %v581
    %612 = vmatprep.subr.mxu0 0.0
    %613 = vmatpush1.msra.mxu0 %v582
    %614 = vmatprep.subr.mxu0 0.0
    %615 = vmatpush1.msra.mxu0 %v583
    %616 = vmatprep.subr.mxu0 0.0
    %617 = vmatpush1.msra.mxu0 %v584
    %618 = vmatprep.subr.mxu0 0.0
    %619 = vmatpush1.msra.mxu0 %v585
    %620 = vmatprep.subr.mxu0 0.0
    %621 = vmatpush1.msra.mxu0 %v586
    %622 = vmatprep.subr.mxu0 0.0
    %623 = vmatpush1.msra.mxu0 %v587
    %624 = vmatprep.subr.mxu0 0.0
    %625 = vmatpush1.msra.mxu0 %v588
    %626 = vmatprep.subr.mxu0 0.0
    %627 = vmatpush1.msra.mxu0 %v589
    %628 = vmatprep.subr.mxu0 0.0
    %629 = vmatpush1.msra.mxu0 %v590
    %630 = vmatprep.subr.mxu0 0.0
    %631 = vmatpush1.msra.mxu0 %v591
    %632 = vmatprep.subr.mxu0 0.0
    %633 = vmatpush1.msra.mxu0 0.0
    %634 = vmatprep.subr.mxu0 0.0
    %635 = vmatpush1.msra.mxu0 0.0
    %636 = vmatprep.subr.mxu0 0.0
    %637 = vmatpush1.msra.mxu0 0.0
    %638 = vmatprep.subr.mxu0 0.0
    %639 = vmatpush1.msra.mxu0 0.0
    %640 = vmatprep.subr.mxu0 0.0
    %641 = vmatpush1.msra.mxu0 0.0
    %642 = vmatprep.subr.mxu0 0.0
    %643 = vmatpush1.msra.mxu0 0.0
    %644 = vmatprep.subr.mxu0 0.0
    %645 = vmatpush1.msra.mxu0 0.0
    %646 = vmatprep.subr.mxu0 0.0
    %647 = vmatpush1.msra.mxu0 0.0
    %648 = vmatprep.subr.mxu0 0.0
    %649 = vmatpush1.msra.mxu0 0.0
    %650 = vmatprep.subr.mxu0 0.0
    %651 = vmatpush1.msra.mxu0 0.0
    %652 = vmatprep.subr.mxu0 0.0
    %653 = vmatpush1.msra.mxu0 0.0
    %654 = vmatprep.subr.mxu0 0.0
    %655 = vmatpush1.msra.mxu0 0.0
    %656 = vmatprep.subr.mxu0 0.0
    %657 = vmatpush1.msra.mxu0 0.0
    %658 = vmatprep.subr.mxu0 0.0
    %659 = vmatpush1.msra.mxu0 0.0
    %660 = vmatprep.subr.mxu0 0.0
    %661 = vmatpush1.msra.mxu0 0.0
    %662 = vmatprep.subr.mxu0 0.0
    %663 = vmatpush1.msra.mxu0 0.0
    %664 = vmatprep.mubr.f32.mxu0 0.0
    %665 = vmatmul.mubr.f32.gmra.mrb[0].mxu0 %v479
    %v666 = vpop.f32.mrb[0].mxu0
    %v667 = vadd.f32 %v598, %v666
    %v668 = vpop.f32.mrb[0].mxu0
    %669 = vdwg.mxu0
    %670 = vst [vmem:[#allocation11] sm:$0xff] %v572
    %671 = vst [vmem:[#allocation12] sm:$0xff] %v667
    %v672 = vld [vmem:[#allocation8] sm:$0xff]
    %v673 = vmul.f32 %v667, 0.5
    %v674 = vmul.f32 %v673, 1.442695
    %v675 = vpow.pop %v674
    %v676 = vmul.f32 %v672, %v675
    %v677 = vadd.f32 %v572, %v676
    %s678 = scalar_lea.vmem [#allocation10], 768
    %v679 = vld [vmem:[%s678] sm:$0xff]
    %v680 = vld [vmem:[%s678 + $0x8] sm:$0xff]
    %v681 = vld [vmem:[%s678 + $0x10] sm:$0xff]
    %v682 = vld [vmem:[%s678 + $0x18] sm:$0xff]
    %v683 = vld [vmem:[%s678 + $0x20] sm:$0xff]
    %v684 = vld [vmem:[%s678 + $0x28] sm:$0xff]
    %v685 = vld [vmem:[%s678 + $0x30] sm:$0xff]
    %v686 = vld [vmem:[%s678 + $0x38] sm:$0xff]
    %v687 = vld [vmem:[%s678 + $0x40] sm:$0xff]
    %v688 = vld [vmem:[%s678 + $0x48] sm:$0xff]
    %v689 = vld [vmem:[%s678 + $0x50] sm:$0xff]
    %v690 = vld [vmem:[%s678 + $0x58] sm:$0xff]
    %v691 = vld [vmem:[%s678 + $0x60] sm:$0xff]
    %v692 = vld [vmem:[%s678 + $0x68] sm:$0xff]
    %v693 = vld [vmem:[%s678 + $0x70] sm:$0xff]
    %v694 = vld [vmem:[%s678 + $0x78] sm:$0xff]
    %s695 = scalar_lea.vmem %s5, 6
    %v696 = vld [vmem:[%s695] sm:$0x1]
    %v698 = vlaneseq
    %v699 = vshrl.u32 %v698, 7
    %v700 = vsub.s32 0, %v699
    %v701 = vrot.slane %v696, %v700
    %703 = vmatprep.subr.mxu0 0.0
    %704 = vmatpush1.msra.mxu0 %v679
    %705 = vmatprep.subr.mxu0 0.0
    %706 = vmatpush1.msra.mxu0 %v680
    %707 = vmatprep.subr.mxu0 0.0
    %708 = vmatpush1.msra.mxu0 %v681
    %709 = vmatprep.subr.mxu0 0.0
    %710 = vmatpush1.msra.mxu0 %v682
    %711 = vmatprep.subr.mxu0 0.0
    %712 = vmatpush1.msra.mxu0 %v683
    %713 = vmatprep.subr.mxu0 0.0
    %714 = vmatpush1.msra.mxu0 %v684
    %715 = vmatprep.subr.mxu0 0.0
    %716 = vmatpush1.msra.mxu0 %v685
    %717 = vmatprep.subr.mxu0 0.0
    %718 = vmatpush1.msra.mxu0 %v686
    %719 = vmatprep.subr.mxu0 0.0
    %720 = vmatpush1.msra.mxu0 %v687
    %721 = vmatprep.subr.mxu0 0.0
    %722 = vmatpush1.msra.mxu0 %v688
    %723 = vmatprep.subr.mxu0 0.0
    %724 = vmatpush1.msra.mxu0 %v689
    %725 = vmatprep.subr.mxu0 0.0
    %726 = vmatpush1.msra.mxu0 %v690
    %727 = vmatprep.subr.mxu0 0.0
    %728 = vmatpush1.msra.mxu0 %v691
    %729 = vmatprep.subr.mxu0 0.0
    %730 = vmatpush1.msra.mxu0 %v692
    %731 = vmatprep.subr.mxu0 0.0
    %732 = vmatpush1.msra.mxu0 %v693
    %733 = vmatprep.subr.mxu0 0.0
    %734 = vmatpush1.msra.mxu0 %v694
    %735 = vmatprep.subr.mxu0 0.0
    %736 = vmatpush1.msra.mxu0 0.0
    %737 = vmatprep.subr.mxu0 0.0
    %738 = vmatpush1.msra.mxu0 0.0
    %739 = vmatprep.subr.mxu0 0.0
    %740 = vmatpush1.msra.mxu0 0.0
    %741 = vmatprep.subr.mxu0 0.0
    %742 = vmatpush1.msra.mxu0 0.0
    %743 = vmatprep.subr.mxu0 0.0
    %744 = vmatpush1.msra.mxu0 0.0
    %745 = vmatprep.subr.mxu0 0.0
    %746 = vmatpush1.msra.mxu0 0.0
    %747 = vmatprep.subr.mxu0 0.0
    %748 = vmatpush1.msra.mxu0 0.0
    %749 = vmatprep.subr.mxu0 0.0
    %750 = vmatpush1.msra.mxu0 0.0
    %751 = vmatprep.subr.mxu0 0.0
    %752 = vmatpush1.msra.mxu0 0.0
    %753 = vmatprep.subr.mxu0 0.0
    %754 = vmatpush1.msra.mxu0 0.0
    %755 = vmatprep.subr.mxu0 0.0
    %756 = vmatpush1.msra.mxu0 0.0
    %757 = vmatprep.subr.mxu0 0.0
    %758 = vmatpush1.msra.mxu0 0.0
    %759 = vmatprep.subr.mxu0 0.0
    %760 = vmatpush1.msra.mxu0 0.0
    %761 = vmatprep.subr.mxu0 0.0
    %762 = vmatpush1.msra.mxu0 0.0
    %763 = vmatprep.subr.mxu0 0.0
    %764 = vmatpush1.msra.mxu0 0.0
    %765 = vmatprep.subr.mxu0 0.0
    %766 = vmatpush1.msra.mxu0 0.0
    %767 = vmatprep.mubr.f32.mxu0 0.0
    %768 = vmatmul.mubr.f32.gmra.mrb[0].mxu0 %v677
    %v769 = vpop.f32.mrb[0].mxu0
    %v770 = vadd.f32 %v701, %v769
    %v771 = vpop.f32.mrb[0].mxu0
    %772 = vdwg.mxu0
    %v773 = vmax.f32 %v770, 0.0
    %s774 = scalar_lea.vmem [#allocation10], 896
    %v775 = vld [vmem:[%s774] sm:$0xff]
    %v776 = vld [vmem:[%s774 + $0x8] sm:$0xff]
    %v777 = vld [vmem:[%s774 + $0x10] sm:$0xff]
    %v778 = vld [vmem:[%s774 + $0x18] sm:$0xff]
    %v779 = vld [vmem:[%s774 + $0x20] sm:$0xff]
    %v780 = vld [vmem:[%s774 + $0x28] sm:$0xff]
    %v781 = vld [vmem:[%s774 + $0x30] sm:$0xff]
    %v782 = vld [vmem:[%s774 + $0x38] sm:$0xff]
    %v783 = vld [vmem:[%s774 + $0x40] sm:$0xff]
    %v784 = vld [vmem:[%s774 + $0x48] sm:$0xff]
    %v785 = vld [vmem:[%s774 + $0x50] sm:$0xff]
    %v786 = vld [vmem:[%s774 + $0x58] sm:$0xff]
    %v787 = vld [vmem:[%s774 + $0x60] sm:$0xff]
    %v788 = vld [vmem:[%s774 + $0x68] sm:$0xff]
    %v789 = vld [vmem:[%s774 + $0x70] sm:$0xff]
    %v790 = vld [vmem:[%s774 + $0x78] sm:$0xff]
    %s791 = scalar_lea.vmem %s5, 7
    %v792 = vld [vmem:[%s791] sm:$0x1]
    %v794 = vlaneseq
    %v795 = vshrl.u32 %v794, 7
    %v796 = vsub.s32 0, %v795
    %v797 = vrot.slane %v792, %v796
    %799 = vmatprep.subr.mxu0 0.0
    %800 = vmatpush1.msra.mxu0 %v775
    %801 = vmatprep.subr.mxu0 0.0
    %802 = vmatpush1.msra.mxu0 %v776
    %803 = vmatprep.subr.mxu0 0.0
    %804 = vmatpush1.msra.mxu0 %v777
    %805 = vmatprep.subr.mxu0 0.0
    %806 = vmatpush1.msra.mxu0 %v778
    %807 = vmatprep.subr.mxu0 0.0
    %808 = vmatpush1.msra.mxu0 %v779
    %809 = vmatprep.subr.mxu0 0.0
    %810 = vmatpush1.msra.mxu0 %v780
    %811 = vmatprep.subr.mxu0 0.0
    %812 = vmatpush1.msra.mxu0 %v781
    %813 = vmatprep.subr.mxu0 0.0
    %814 = vmatpush1.msra.mxu0 %v782
    %815 = vmatprep.subr.mxu0 0.0
    %816 = vmatpush1.msra.mxu0 %v783
    %817 = vmatprep.subr.mxu0 0.0
    %818 = vmatpush1.msra.mxu0 %v784
    %819 = vmatprep.subr.mxu0 0.0
    %820 = vmatpush1.msra.mxu0 %v785
    %821 = vmatprep.subr.mxu0 0.0
    %822 = vmatpush1.msra.mxu0 %v786
    %823 = vmatprep.subr.mxu0 0.0
    %824 = vmatpush1.msra.mxu0 %v787
    %825 = vmatprep.subr.mxu0 0.0
    %826 = vmatpush1.msra.mxu0 %v788
    %827 = vmatprep.subr.mxu0 0.0
    %828 = vmatpush1.msra.mxu0 %v789
    %829 = vmatprep.subr.mxu0 0.0
    %830 = vmatpush1.msra.mxu0 %v790
    %831 = vmatprep.subr.mxu0 0.0
    %832 = vmatpush1.msra.mxu0 0.0
    %833 = vmatprep.subr.mxu0 0.0
    %834 = vmatpush1.msra.mxu0 0.0
    %835 = vmatprep.subr.mxu0 0.0
    %836 = vmatpush1.msra.mxu0 0.0
    %837 = vmatprep.subr.mxu0 0.0
    %838 = vmatpush1.msra.mxu0 0.0
    %839 = vmatprep.subr.mxu0 0.0
    %840 = vmatpush1.msra.mxu0 0.0
    %841 = vmatprep.subr.mxu0 0.0
    %842 = vmatpush1.msra.mxu0 0.0
    %843 = vmatprep.subr.mxu0 0.0
    %844 = vmatpush1.msra.mxu0 0.0
    %845 = vmatprep.subr.mxu0 0.0
    %846 = vmatpush1.msra.mxu0 0.0
    %847 = vmatprep.subr.mxu0 0.0
    %848 = vmatpush1.msra.mxu0 0.0
    %849 = vmatprep.subr.mxu0 0.0
    %850 = vmatpush1.msra.mxu0 0.0
    %851 = vmatprep.subr.mxu0 0.0
    %852 = vmatpush1.msra.mxu0 0.0
    %853 = vmatprep.subr.mxu0 0.0
    %854 = vmatpush1.msra.mxu0 0.0
    %855 = vmatprep.subr.mxu0 0.0
    %856 = vmatpush1.msra.mxu0 0.0
    %857 = vmatprep.subr.mxu0 0.0
    %858 = vmatpush1.msra.mxu0 0.0
    %859 = vmatprep.subr.mxu0 0.0
    %860 = vmatpush1.msra.mxu0 0.0
    %861 = vmatprep.subr.mxu0 0.0
    %862 = vmatpush1.msra.mxu0 0.0
    %863 = vmatprep.mubr.f32.mxu0 0.0
    %864 = vmatmul.mubr.f32.gmra.mrb[0].mxu0 %v773
    %v865 = vpop.f32.mrb[0].mxu0
    %v866 = vadd.f32 %v797, %v865
    %v867 = vpop.f32.mrb[0].mxu0
    %868 = vdwg.mxu0
    %v869 = vmax.f32 %v866, 0.0
    %s870 = scalar_lea.vmem [#allocation10], 1024
    %v871 = vld [vmem:[%s870] sm:$0xff]
    %v872 = vld [vmem:[%s870 + $0x8] sm:$0xff]
    %v873 = vld [vmem:[%s870 + $0x10] sm:$0xff]
    %v874 = vld [vmem:[%s870 + $0x18] sm:$0xff]
    %v875 = vld [vmem:[%s870 + $0x20] sm:$0xff]
    %v876 = vld [vmem:[%s870 + $0x28] sm:$0xff]
    %v877 = vld [vmem:[%s870 + $0x30] sm:$0xff]
    %v878 = vld [vmem:[%s870 + $0x38] sm:$0xff]
    %v879 = vld [vmem:[%s870 + $0x40] sm:$0xff]
    %v880 = vld [vmem:[%s870 + $0x48] sm:$0xff]
    %v881 = vld [vmem:[%s870 + $0x50] sm:$0xff]
    %v882 = vld [vmem:[%s870 + $0x58] sm:$0xff]
    %v883 = vld [vmem:[%s870 + $0x60] sm:$0xff]
    %v884 = vld [vmem:[%s870 + $0x68] sm:$0xff]
    %v885 = vld [vmem:[%s870 + $0x70] sm:$0xff]
    %v886 = vld [vmem:[%s870 + $0x78] sm:$0xff]
    %s887 = scalar_lea.vmem %s5, 8
    %v888 = vld [vmem:[%s887] sm:$0x1]
    %v890 = vlaneseq
    %v891 = vshrl.u32 %v890, 7
    %v892 = vsub.s32 0, %v891
    %v893 = vrot.slane %v888, %v892
    %895 = vmatprep.subr.mxu0 0.0
    %896 = vmatpush1.msra.mxu0 %v871
    %897 = vmatprep.subr.mxu0 0.0
    %898 = vmatpush1.msra.mxu0 %v872
    %899 = vmatprep.subr.mxu0 0.0
    %900 = vmatpush1.msra.mxu0 %v873
    %901 = vmatprep.subr.mxu0 0.0
    %902 = vmatpush1.msra.mxu0 %v874
    %903 = vmatprep.subr.mxu0 0.0
    %904 = vmatpush1.msra.mxu0 %v875
    %905 = vmatprep.subr.mxu0 0.0
    %906 = vmatpush1.msra.mxu0 %v876
    %907 = vmatprep.subr.mxu0 0.0
    %908 = vmatpush1.msra.mxu0 %v877
    %909 = vmatprep.subr.mxu0 0.0
    %910 = vmatpush1.msra.mxu0 %v878
    %911 = vmatprep.subr.mxu0 0.0
    %912 = vmatpush1.msra.mxu0 %v879
    %913 = vmatprep.subr.mxu0 0.0
    %914 = vmatpush1.msra.mxu0 %v880
    %915 = vmatprep.subr.mxu0 0.0
    %916 = vmatpush1.msra.mxu0 %v881
    %917 = vmatprep.subr.mxu0 0.0
    %918 = vmatpush1.msra.mxu0 %v882
    %919 = vmatprep.subr.mxu0 0.0
    %920 = vmatpush1.msra.mxu0 %v883
    %921 = vmatprep.subr.mxu0 0.0
    %922 = vmatpush1.msra.mxu0 %v884
    %923 = vmatprep.subr.mxu0 0.0
    %924 = vmatpush1.msra.mxu0 %v885
    %925 = vmatprep.subr.mxu0 0.0
    %926 = vmatpush1.msra.mxu0 %v886
    %927 = vmatprep.subr.mxu0 0.0
    %928 = vmatpush1.msra.mxu0 0.0
    %929 = vmatprep.subr.mxu0 0.0
    %930 = vmatpush1.msra.mxu0 0.0
    %931 = vmatprep.subr.mxu0 0.0
    %932 = vmatpush1.msra.mxu0 0.0
    %933 = vmatprep.subr.mxu0 0.0
    %934 = vmatpush1.msra.mxu0 0.0
    %935 = vmatprep.subr.mxu0 0.0
    %936 = vmatpush1.msra.mxu0 0.0
    %937 = vmatprep.subr.mxu0 0.0
    %938 = vmatpush1.msra.mxu0 0.0
    %939 = vmatprep.subr.mxu0 0.0
    %940 = vmatpush1.msra.mxu0 0.0
    %941 = vmatprep.subr.mxu0 0.0
    %942 = vmatpush1.msra.mxu0 0.0
    %943 = vmatprep.subr.mxu0 0.0
    %944 = vmatpush1.msra.mxu0 0.0
    %945 = vmatprep.subr.mxu0 0.0
    %946 = vmatpush1.msra.mxu0 0.0
    %947 = vmatprep.subr.mxu0 0.0
    %948 = vmatpush1.msra.mxu0 0.0
    %949 = vmatprep.subr.mxu0 0.0
    %950 = vmatpush1.msra.mxu0 0.0
    %951 = vmatprep.subr.mxu0 0.0
    %952 = vmatpush1.msra.mxu0 0.0
    %953 = vmatprep.subr.mxu0 0.0
    %954 = vmatpush1.msra.mxu0 0.0
    %955 = vmatprep.subr.mxu0 0.0
    %956 = vmatpush1.msra.mxu0 0.0
    %957 = vmatprep.subr.mxu0 0.0
    %958 = vmatpush1.msra.mxu0 0.0
    %959 = vmatprep.mubr.f32.mxu0 0.0
    %960 = vmatmul.mubr.f32.gmra.mrb[0].mxu0 %v869
    %v961 = vpop.f32.mrb[0].mxu0
    %v962 = vadd.f32 %v893, %v961
    %v963 = vpop.f32.mrb[0].mxu0
    %964 = vdwg.mxu0
    %v965 = vxor.u32 %v962, 2147483648
    %v966 = vmul.f32 %v965, 1.442695
    %v967 = vpow.pop %v966
    %v968 = vadd.f32 %v967, 1.0
    %v969 = vrcp.pop %v968
    %v970 = vmul.f32 1.0, %v969
    %971 = vst [vmem:[#allocation14] sm:$0xff] %v970
    %s972 = scalar_lea.vmem [#allocation10], 1152
    %v973 = vld [vmem:[%s972] sm:$0xff]
    %v974 = vld [vmem:[%s972 + $0x8] sm:$0xff]
    %v975 = vld [vmem:[%s972 + $0x10] sm:$0xff]
    %v976 = vld [vmem:[%s972 + $0x18] sm:$0xff]
    %v977 = vld [vmem:[%s972 + $0x20] sm:$0xff]
    %v978 = vld [vmem:[%s972 + $0x28] sm:$0xff]
    %v979 = vld [vmem:[%s972 + $0x30] sm:$0xff]
    %v980 = vld [vmem:[%s972 + $0x38] sm:$0xff]
    %v981 = vld [vmem:[%s972 + $0x40] sm:$0xff]
    %v982 = vld [vmem:[%s972 + $0x48] sm:$0xff]
    %v983 = vld [vmem:[%s972 + $0x50] sm:$0xff]
    %v984 = vld [vmem:[%s972 + $0x58] sm:$0xff]
    %v985 = vld [vmem:[%s972 + $0x60] sm:$0xff]
    %v986 = vld [vmem:[%s972 + $0x68] sm:$0xff]
    %v987 = vld [vmem:[%s972 + $0x70] sm:$0xff]
    %v988 = vld [vmem:[%s972 + $0x78] sm:$0xff]
    %s989 = scalar_lea.vmem %s5, 9
    %v990 = vld [vmem:[%s989] sm:$0x1]
    %v992 = vlaneseq
    %v993 = vshrl.u32 %v992, 7
    %v994 = vsub.s32 0, %v993
    %v995 = vrot.slane %v990, %v994
    %997 = vmatprep.subr.mxu0 0.0
    %998 = vmatpush1.msra.mxu0 %v973
    %999 = vmatprep.subr.mxu0 0.0
    %1000 = vmatpush1.msra.mxu0 %v974
    %1001 = vmatprep.subr.mxu0 0.0
    %1002 = vmatpush1.msra.mxu0 %v975
    %1003 = vmatprep.subr.mxu0 0.0
    %1004 = vmatpush1.msra.mxu0 %v976
    %1005 = vmatprep.subr.mxu0 0.0
    %1006 = vmatpush1.msra.mxu0 %v977
    %1007 = vmatprep.subr.mxu0 0.0
    %1008 = vmatpush1.msra.mxu0 %v978
    %1009 = vmatprep.subr.mxu0 0.0
    %1010 = vmatpush1.msra.mxu0 %v979
    %1011 = vmatprep.subr.mxu0 0.0
    %1012 = vmatpush1.msra.mxu0 %v980
    %1013 = vmatprep.subr.mxu0 0.0
    %1014 = vmatpush1.msra.mxu0 %v981
    %1015 = vmatprep.subr.mxu0 0.0
    %1016 = vmatpush1.msra.mxu0 %v982
    %1017 = vmatprep.subr.mxu0 0.0
    %1018 = vmatpush1.msra.mxu0 %v983
    %1019 = vmatprep.subr.mxu0 0.0
    %1020 = vmatpush1.msra.mxu0 %v984
    %1021 = vmatprep.subr.mxu0 0.0
    %1022 = vmatpush1.msra.mxu0 %v985
    %1023 = vmatprep.subr.mxu0 0.0
    %1024 = vmatpush1.msra.mxu0 %v986
    %1025 = vmatprep.subr.mxu0 0.0
    %1026 = vmatpush1.msra.mxu0 %v987
    %1027 = vmatprep.subr.mxu0 0.0
    %1028 = vmatpush1.msra.mxu0 %v988
    %1029 = vmatprep.subr.mxu0 0.0
    %1030 = vmatpush1.msra.mxu0 0.0
    %1031 = vmatprep.subr.mxu0 0.0
    %1032 = vmatpush1.msra.mxu0 0.0
    %1033 = vmatprep.subr.mxu0 0.0
    %1034 = vmatpush1.msra.mxu0 0.0
    %1035 = vmatprep.subr.mxu0 0.0
    %1036 = vmatpush1.msra.mxu0 0.0
    %1037 = vmatprep.subr.mxu0 0.0
    %1038 = vmatpush1.msra.mxu0 0.0
    %1039 = vmatprep.subr.mxu0 0.0
    %1040 = vmatpush1.msra.mxu0 0.0
    %1041 = vmatprep.subr.mxu0 0.0
    %1042 = vmatpush1.msra.mxu0 0.0
    %1043 = vmatprep.subr.mxu0 0.0
    %1044 = vmatpush1.msra.mxu0 0.0
    %1045 = vmatprep.subr.mxu0 0.0
    %1046 = vmatpush1.msra.mxu0 0.0
    %1047 = vmatprep.subr.mxu0 0.0
    %1048 = vmatpush1.msra.mxu0 0.0
    %1049 = vmatprep.subr.mxu0 0.0
    %1050 = vmatpush1.msra.mxu0 0.0
    %1051 = vmatprep.subr.mxu0 0.0
    %1052 = vmatpush1.msra.mxu0 0.0
    %1053 = vmatprep.subr.mxu0 0.0
    %1054 = vmatpush1.msra.mxu0 0.0
    %1055 = vmatprep.subr.mxu0 0.0
    %1056 = vmatpush1.msra.mxu0 0.0
    %1057 = vmatprep.subr.mxu0 0.0
    %1058 = vmatpush1.msra.mxu0 0.0
    %1059 = vmatprep.subr.mxu0 0.0
    %1060 = vmatpush1.msra.mxu0 0.0
    %1061 = vmatprep.mubr.f32.mxu0 0.0
    %1062 = vmatmul.mubr.f32.gmra.mrb[0].mxu0 %v869
    %v1063 = vpop.f32.mrb[0].mxu0
    %v1064 = vadd.f32 %v995, %v1063
    %v1065 = vpop.f32.mrb[0].mxu0
    %1066 = vdwg.mxu0
    %v1067 = vxor.u32 %v1064, 2147483648
    %v1068 = vmul.f32 %v1067, 1.442695
    %v1069 = vpow.pop %v1068
    %v1070 = vadd.f32 %v1069, 1.0
    %v1071 = vrcp.pop %v1070
    %v1072 = vmul.f32 1.0, %v1071
    %1073 = vst [vmem:[#allocation15] sm:$0xff] %v1072
    %s1074 = scalar_lea.vmem [#allocation10], 1280
    %v1075 = vld [vmem:[%s1074] sm:$0xff]
    %v1076 = vld [vmem:[%s1074 + $0x8] sm:$0xff]
    %v1077 = vld [vmem:[%s1074 + $0x10] sm:$0xff]
    %v1078 = vld [vmem:[%s1074 + $0x18] sm:$0xff]
    %v1079 = vld [vmem:[%s1074 + $0x20] sm:$0xff]
    %v1080 = vld [vmem:[%s1074 + $0x28] sm:$0xff]
    %v1081 = vld [vmem:[%s1074 + $0x30] sm:$0xff]
    %v1082 = vld [vmem:[%s1074 + $0x38] sm:$0xff]
    %v1083 = vld [vmem:[%s1074 + $0x40] sm:$0xff]
    %v1084 = vld [vmem:[%s1074 + $0x48] sm:$0xff]
    %v1085 = vld [vmem:[%s1074 + $0x50] sm:$0xff]
    %v1086 = vld [vmem:[%s1074 + $0x58] sm:$0xff]
    %v1087 = vld [vmem:[%s1074 + $0x60] sm:$0xff]
    %v1088 = vld [vmem:[%s1074 + $0x68] sm:$0xff]
    %v1089 = vld [vmem:[%s1074 + $0x70] sm:$0xff]
    %v1090 = vld [vmem:[%s1074 + $0x78] sm:$0xff]
    %s1091 = scalar_lea.vmem %s5, 10
    %v1092 = vld [vmem:[%s1091] sm:$0x1]
    %v1094 = vlaneseq
    %v1095 = vshrl.u32 %v1094, 7
    %v1096 = vsub.s32 0, %v1095
    %v1097 = vrot.slane %v1092, %v1096
    %1099 = vmatprep.subr.mxu0 0.0
    %1100 = vmatpush1.msra.mxu0 %v1075
    %1101 = vmatprep.subr.mxu0 0.0
    %1102 = vmatpush1.msra.mxu0 %v1076
    %1103 = vmatprep.subr.mxu0 0.0
    %1104 = vmatpush1.msra.mxu0 %v1077
    %1105 = vmatprep.subr.mxu0 0.0
    %1106 = vmatpush1.msra.mxu0 %v1078
    %1107 = vmatprep.subr.mxu0 0.0
    %1108 = vmatpush1.msra.mxu0 %v1079
    %1109 = vmatprep.subr.mxu0 0.0
    %1110 = vmatpush1.msra.mxu0 %v1080
    %1111 = vmatprep.subr.mxu0 0.0
    %1112 = vmatpush1.msra.mxu0 %v1081
    %1113 = vmatprep.subr.mxu0 0.0
    %1114 = vmatpush1.msra.mxu0 %v1082
    %1115 = vmatprep.subr.mxu0 0.0
    %1116 = vmatpush1.msra.mxu0 %v1083
    %1117 = vmatprep.subr.mxu0 0.0
    %1118 = vmatpush1.msra.mxu0 %v1084
    %1119 = vmatprep.subr.mxu0 0.0
    %1120 = vmatpush1.msra.mxu0 %v1085
    %1121 = vmatprep.subr.mxu0 0.0
    %1122 = vmatpush1.msra.mxu0 %v1086
    %1123 = vmatprep.subr.mxu0 0.0
    %1124 = vmatpush1.msra.mxu0 %v1087
    %1125 = vmatprep.subr.mxu0 0.0
    %1126 = vmatpush1.msra.mxu0 %v1088
    %1127 = vmatprep.subr.mxu0 0.0
    %1128 = vmatpush1.msra.mxu0 %v1089
    %1129 = vmatprep.subr.mxu0 0.0
    %1130 = vmatpush1.msra.mxu0 %v1090
    %1131 = vmatprep.subr.mxu0 0.0
    %1132 = vmatpush1.msra.mxu0 0.0
    %1133 = vmatprep.subr.mxu0 0.0
    %1134 = vmatpush1.msra.mxu0 0.0
    %1135 = vmatprep.subr.mxu0 0.0
    %1136 = vmatpush1.msra.mxu0 0.0
    %1137 = vmatprep.subr.mxu0 0.0
    %1138 = vmatpush1.msra.mxu0 0.0
    %1139 = vmatprep.subr.mxu0 0.0
    %1140 = vmatpush1.msra.mxu0 0.0
    %1141 = vmatprep.subr.mxu0 0.0
    %1142 = vmatpush1.msra.mxu0 0.0
    %1143 = vmatprep.subr.mxu0 0.0
    %1144 = vmatpush1.msra.mxu0 0.0
    %1145 = vmatprep.subr.mxu0 0.0
    %1146 = vmatpush1.msra.mxu0 0.0
    %1147 = vmatprep.subr.mxu0 0.0
    %1148 = vmatpush1.msra.mxu0 0.0
    %1149 = vmatprep.subr.mxu0 0.0
    %1150 = vmatpush1.msra.mxu0 0.0
    %1151 = vmatprep.subr.mxu0 0.0
    %1152 = vmatpush1.msra.mxu0 0.0
    %1153 = vmatprep.subr.mxu0 0.0
    %1154 = vmatpush1.msra.mxu0 0.0
    %1155 = vmatprep.subr.mxu0 0.0
    %1156 = vmatpush1.msra.mxu0 0.0
    %1157 = vmatprep.subr.mxu0 0.0
    %1158 = vmatpush1.msra.mxu0 0.0
    %1159 = vmatprep.subr.mxu0 0.0
    %1160 = vmatpush1.msra.mxu0 0.0
    %1161 = vmatprep.subr.mxu0 0.0
    %1162 = vmatpush1.msra.mxu0 0.0
    %1163 = vmatprep.mubr.f32.mxu0 0.0
    %1164 = vmatmul.mubr.f32.gmra.mrb[0].mxu0 %v869
    %v1165 = vpop.f32.mrb[0].mxu0
    %v1166 = vadd.f32 %v1097, %v1165
    %v1167 = vpop.f32.mrb[0].mxu0
    %1168 = vdwg.mxu0
    %v1169 = vxor.u32 %v1166, 2147483648
    %v1170 = vmul.f32 %v1169, 1.442695
    %v1171 = vpow.pop %v1170
    %v1172 = vadd.f32 %v1171, 1.0
    %v1173 = vrcp.pop %v1172
    %v1174 = vmul.f32 1.0, %v1173
    %1175 = vst [vmem:[#allocation17] sm:$0xff] %v1174
    %s1176 = scalar_lea.vmem [#allocation10], 1408
    %v1177 = vld [vmem:[%s1176] sm:$0xff]
    %v1178 = vld [vmem:[%s1176 + $0x8] sm:$0xff]
    %v1179 = vld [vmem:[%s1176 + $0x10] sm:$0xff]
    %v1180 = vld [vmem:[%s1176 + $0x18] sm:$0xff]
    %v1181 = vld [vmem:[%s1176 + $0x20] sm:$0xff]
    %v1182 = vld [vmem:[%s1176 + $0x28] sm:$0xff]
    %v1183 = vld [vmem:[%s1176 + $0x30] sm:$0xff]
    %v1184 = vld [vmem:[%s1176 + $0x38] sm:$0xff]
    %v1185 = vld [vmem:[%s1176 + $0x40] sm:$0xff]
    %v1186 = vld [vmem:[%s1176 + $0x48] sm:$0xff]
    %v1187 = vld [vmem:[%s1176 + $0x50] sm:$0xff]
    %v1188 = vld [vmem:[%s1176 + $0x58] sm:$0xff]
    %v1189 = vld [vmem:[%s1176 + $0x60] sm:$0xff]
    %v1190 = vld [vmem:[%s1176 + $0x68] sm:$0xff]
    %v1191 = vld [vmem:[%s1176 + $0x70] sm:$0xff]
    %v1192 = vld [vmem:[%s1176 + $0x78] sm:$0xff]
    %s1193 = scalar_lea.vmem %s5, 11
    %v1194 = vld [vmem:[%s1193] sm:$0x1]
    %v1196 = vlaneseq
    %v1197 = vshrl.u32 %v1196, 7
    %v1198 = vsub.s32 0, %v1197
    %v1199 = vrot.slane %v1194, %v1198
    %1201 = vmatprep.subr.mxu0 0.0
    %1202 = vmatpush1.msra.mxu0 %v1177
    %1203 = vmatprep.subr.mxu0 0.0
    %1204 = vmatpush1.msra.mxu0 %v1178
    %1205 = vmatprep.subr.mxu0 0.0
    %1206 = vmatpush1.msra.mxu0 %v1179
    %1207 = vmatprep.subr.mxu0 0.0
    %1208 = vmatpush1.msra.mxu0 %v1180
    %1209 = vmatprep.subr.mxu0 0.0
    %1210 = vmatpush1.msra.mxu0 %v1181
    %1211 = vmatprep.subr.mxu0 0.0
    %1212 = vmatpush1.msra.mxu0 %v1182
    %1213 = vmatprep.subr.mxu0 0.0
    %1214 = vmatpush1.msra.mxu0 %v1183
    %1215 = vmatprep.subr.mxu0 0.0
    %1216 = vmatpush1.msra.mxu0 %v1184
    %1217 = vmatprep.subr.mxu0 0.0
    %1218 = vmatpush1.msra.mxu0 %v1185
    %1219 = vmatprep.subr.mxu0 0.0
    %1220 = vmatpush1.msra.mxu0 %v1186
    %1221 = vmatprep.subr.mxu0 0.0
    %1222 = vmatpush1.msra.mxu0 %v1187
    %1223 = vmatprep.subr.mxu0 0.0
    %1224 = vmatpush1.msra.mxu0 %v1188
    %1225 = vmatprep.subr.mxu0 0.0
    %1226 = vmatpush1.msra.mxu0 %v1189
    %1227 = vmatprep.subr.mxu0 0.0
    %1228 = vmatpush1.msra.mxu0 %v1190
    %1229 = vmatprep.subr.mxu0 0.0
    %1230 = vmatpush1.msra.mxu0 %v1191
    %1231 = vmatprep.subr.mxu0 0.0
    %1232 = vmatpush1.msra.mxu0 %v1192
    %1233 = vmatprep.subr.mxu0 0.0
    %1234 = vmatpush1.msra.mxu0 0.0
    %1235 = vmatprep.subr.mxu0 0.0
    %1236 = vmatpush1.msra.mxu0 0.0
    %1237 = vmatprep.subr.mxu0 0.0
    %1238 = vmatpush1.msra.mxu0 0.0
    %1239 = vmatprep.subr.mxu0 0.0
    %1240 = vmatpush1.msra.mxu0 0.0
    %1241 = vmatprep.subr.mxu0 0.0
    %1242 = vmatpush1.msra.mxu0 0.0
    %1243 = vmatprep.subr.mxu0 0.0
    %1244 = vmatpush1.msra.mxu0 0.0
    %1245 = vmatprep.subr.mxu0 0.0
    %1246 = vmatpush1.msra.mxu0 0.0
    %1247 = vmatprep.subr.mxu0 0.0
    %1248 = vmatpush1.msra.mxu0 0.0
    %1249 = vmatprep.subr.mxu0 0.0
    %1250 = vmatpush1.msra.mxu0 0.0
    %1251 = vmatprep.subr.mxu0 0.0
    %1252 = vmatpush1.msra.mxu0 0.0
    %1253 = vmatprep.subr.mxu0 0.0
    %1254 = vmatpush1.msra.mxu0 0.0
    %1255 = vmatprep.subr.mxu0 0.0
    %1256 = vmatpush1.msra.mxu0 0.0
    %1257 = vmatprep.subr.mxu0 0.0
    %1258 = vmatpush1.msra.mxu0 0.0
    %1259 = vmatprep.subr.mxu0 0.0
    %1260 = vmatpush1.msra.mxu0 0.0
    %1261 = vmatprep.subr.mxu0 0.0
    %1262 = vmatpush1.msra.mxu0 0.0
    %1263 = vmatprep.subr.mxu0 0.0
    %1264 = vmatpush1.msra.mxu0 0.0
    %1265 = vmatprep.mubr.f32.mxu0 0.0
    %1266 = vmatmul.mubr.f32.gmra.mrb[0].mxu0 %v572
    %v1267 = vpop.f32.mrb[0].mxu0
    %v1268 = vadd.f32 %v1199, %v1267
    %v1269 = vpop.f32.mrb[0].mxu0
    %1270 = vdwg.mxu0
    %v1271 = vmax.f32 %v1268, 0.0
    %s1272 = scalar_lea.vmem [#allocation10], 1536
    %v1273 = vld [vmem:[%s1272] sm:$0xff]
    %v1274 = vld [vmem:[%s1272 + $0x8] sm:$0xff]
    %v1275 = vld [vmem:[%s1272 + $0x10] sm:$0xff]
    %v1276 = vld [vmem:[%s1272 + $0x18] sm:$0xff]
    %v1277 = vld [vmem:[%s1272 + $0x20] sm:$0xff]
    %v1278 = vld [vmem:[%s1272 + $0x28] sm:$0xff]
    %v1279 = vld [vmem:[%s1272 + $0x30] sm:$0xff]
    %v1280 = vld [vmem:[%s1272 + $0x38] sm:$0xff]
    %v1281 = vld [vmem:[%s1272 + $0x40] sm:$0xff]
    %v1282 = vld [vmem:[%s1272 + $0x48] sm:$0xff]
    %v1283 = vld [vmem:[%s1272 + $0x50] sm:$0xff]
    %v1284 = vld [vmem:[%s1272 + $0x58] sm:$0xff]
    %v1285 = vld [vmem:[%s1272 + $0x60] sm:$0xff]
    %v1286 = vld [vmem:[%s1272 + $0x68] sm:$0xff]
    %v1287 = vld [vmem:[%s1272 + $0x70] sm:$0xff]
    %v1288 = vld [vmem:[%s1272 + $0x78] sm:$0xff]
    %s1289 = scalar_lea.vmem %s5, 12
    %v1290 = vld [vmem:[%s1289] sm:$0x1]
    %v1292 = vlaneseq
    %v1293 = vshrl.u32 %v1292, 7
    %v1294 = vsub.s32 0, %v1293
    %v1295 = vrot.slane %v1290, %v1294
    %1297 = vmatprep.subr.mxu0 0.0
    %1298 = vmatpush1.msra.mxu0 %v1273
    %1299 = vmatprep.subr.mxu0 0.0
    %1300 = vmatpush1.msra.mxu0 %v1274
    %1301 = vmatprep.subr.mxu0 0.0
    %1302 = vmatpush1.msra.mxu0 %v1275
    %1303 = vmatprep.subr.mxu0 0.0
    %1304 = vmatpush1.msra.mxu0 %v1276
    %1305 = vmatprep.subr.mxu0 0.0
    %1306 = vmatpush1.msra.mxu0 %v1277
    %1307 = vmatprep.subr.mxu0 0.0
    %1308 = vmatpush1.msra.mxu0 %v1278
    %1309 = vmatprep.subr.mxu0 0.0
    %1310 = vmatpush1.msra.mxu0 %v1279
    %1311 = vmatprep.subr.mxu0 0.0
    %1312 = vmatpush1.msra.mxu0 %v1280
    %1313 = vmatprep.subr.mxu0 0.0
    %1314 = vmatpush1.msra.mxu0 %v1281
    %1315 = vmatprep.subr.mxu0 0.0
    %1316 = vmatpush1.msra.mxu0 %v1282
    %1317 = vmatprep.subr.mxu0 0.0
    %1318 = vmatpush1.msra.mxu0 %v1283
    %1319 = vmatprep.subr.mxu0 0.0
    %1320 = vmatpush1.msra.mxu0 %v1284
    %1321 = vmatprep.subr.mxu0 0.0
    %1322 = vmatpush1.msra.mxu0 %v1285
    %1323 = vmatprep.subr.mxu0 0.0
    %1324 = vmatpush1.msra.mxu0 %v1286
    %1325 = vmatprep.subr.mxu0 0.0
    %1326 = vmatpush1.msra.mxu0 %v1287
    %1327 = vmatprep.subr.mxu0 0.0
    %1328 = vmatpush1.msra.mxu0 %v1288
    %1329 = vmatprep.subr.mxu0 0.0
    %1330 = vmatpush1.msra.mxu0 0.0
    %1331 = vmatprep.subr.mxu0 0.0
    %1332 = vmatpush1.msra.mxu0 0.0
    %1333 = vmatprep.subr.mxu0 0.0
    %1334 = vmatpush1.msra.mxu0 0.0
    %1335 = vmatprep.subr.mxu0 0.0
    %1336 = vmatpush1.msra.mxu0 0.0
    %1337 = vmatprep.subr.mxu0 0.0
    %1338 = vmatpush1.msra.mxu0 0.0
    %1339 = vmatprep.subr.mxu0 0.0
    %1340 = vmatpush1.msra.mxu0 0.0
    %1341 = vmatprep.subr.mxu0 0.0
    %1342 = vmatpush1.msra.mxu0 0.0
    %1343 = vmatprep.subr.mxu0 0.0
    %1344 = vmatpush1.msra.mxu0 0.0
    %1345 = vmatprep.subr.mxu0 0.0
    %1346 = vmatpush1.msra.mxu0 0.0
    %1347 = vmatprep.subr.mxu0 0.0
    %1348 = vmatpush1.msra.mxu0 0.0
    %1349 = vmatprep.subr.mxu0 0.0
    %1350 = vmatpush1.msra.mxu0 0.0
    %1351 = vmatprep.subr.mxu0 0.0
    %1352 = vmatpush1.msra.mxu0 0.0
    %1353 = vmatprep.subr.mxu0 0.0
    %1354 = vmatpush1.msra.mxu0 0.0
    %1355 = vmatprep.subr.mxu0 0.0
    %1356 = vmatpush1.msra.mxu0 0.0
    %1357 = vmatprep.subr.mxu0 0.0
    %1358 = vmatpush1.msra.mxu0 0.0
    %1359 = vmatprep.subr.mxu0 0.0
    %1360 = vmatpush1.msra.mxu0 0.0
    %1361 = vmatprep.mubr.f32.mxu0 0.0
    %1362 = vmatmul.mubr.f32.gmra.mrb[0].mxu0 %v1271
    %v1363 = vpop.f32.mrb[0].mxu0
    %v1364 = vadd.f32 %v1295, %v1363
    %v1365 = vpop.f32.mrb[0].mxu0
    %1366 = vdwg.mxu0
    %v1367 = vmax.f32 %v1364, 0.0
    %s1368 = scalar_lea.vmem [#allocation10], 1664
    %v1369 = vld [vmem:[%s1368] sm:$0xff]
    %v1370 = vld [vmem:[%s1368 + $0x8] sm:$0xff]
    %v1371 = vld [vmem:[%s1368 + $0x10] sm:$0xff]
    %v1372 = vld [vmem:[%s1368 + $0x18] sm:$0xff]
    %v1373 = vld [vmem:[%s1368 + $0x20] sm:$0xff]
    %v1374 = vld [vmem:[%s1368 + $0x28] sm:$0xff]
    %v1375 = vld [vmem:[%s1368 + $0x30] sm:$0xff]
    %v1376 = vld [vmem:[%s1368 + $0x38] sm:$0xff]
    %v1377 = vld [vmem:[%s1368 + $0x40] sm:$0xff]
    %v1378 = vld [vmem:[%s1368 + $0x48] sm:$0xff]
    %v1379 = vld [vmem:[%s1368 + $0x50] sm:$0xff]
    %v1380 = vld [vmem:[%s1368 + $0x58] sm:$0xff]
    %v1381 = vld [vmem:[%s1368 + $0x60] sm:$0xff]
    %v1382 = vld [vmem:[%s1368 + $0x68] sm:$0xff]
    %v1383 = vld [vmem:[%s1368 + $0x70] sm:$0xff]
    %v1384 = vld [vmem:[%s1368 + $0x78] sm:$0xff]
    %s1385 = scalar_lea.vmem %s5, 13
    %v1386 = vld [vmem:[%s1385] sm:$0x1]
    %v1388 = vlaneseq
    %v1389 = vshrl.u32 %v1388, 7
    %v1390 = vsub.s32 0, %v1389
    %v1391 = vrot.slane %v1386, %v1390
    %1393 = vmatprep.subr.mxu0 0.0
    %1394 = vmatpush1.msra.mxu0 %v1369
    %1395 = vmatprep.subr.mxu0 0.0
    %1396 = vmatpush1.msra.mxu0 %v1370
    %1397 = vmatprep.subr.mxu0 0.0
    %1398 = vmatpush1.msra.mxu0 %v1371
    %1399 = vmatprep.subr.mxu0 0.0
    %1400 = vmatpush1.msra.mxu0 %v1372
    %1401 = vmatprep.subr.mxu0 0.0
    %1402 = vmatpush1.msra.mxu0 %v1373
    %1403 = vmatprep.subr.mxu0 0.0
    %1404 = vmatpush1.msra.mxu0 %v1374
    %1405 = vmatprep.subr.mxu0 0.0
    %1406 = vmatpush1.msra.mxu0 %v1375
    %1407 = vmatprep.subr.mxu0 0.0
    %1408 = vmatpush1.msra.mxu0 %v1376
    %1409 = vmatprep.subr.mxu0 0.0
    %1410 = vmatpush1.msra.mxu0 %v1377
    %1411 = vmatprep.subr.mxu0 0.0
    %1412 = vmatpush1.msra.mxu0 %v1378
    %1413 = vmatprep.subr.mxu0 0.0
    %1414 = vmatpush1.msra.mxu0 %v1379
    %1415 = vmatprep.subr.mxu0 0.0
    %1416 = vmatpush1.msra.mxu0 %v1380
    %1417 = vmatprep.subr.mxu0 0.0
    %1418 = vmatpush1.msra.mxu0 %v1381
    %1419 = vmatprep.subr.mxu0 0.0
    %1420 = vmatpush1.msra.mxu0 %v1382
    %1421 = vmatprep.subr.mxu0 0.0
    %1422 = vmatpush1.msra.mxu0 %v1383
    %1423 = vmatprep.subr.mxu0 0.0
    %1424 = vmatpush1.msra.mxu0 %v1384
    %1425 = vmatprep.subr.mxu0 0.0
    %1426 = vmatpush1.msra.mxu0 0.0
    %1427 = vmatprep.subr.mxu0 0.0
    %1428 = vmatpush1.msra.mxu0 0.0
    %1429 = vmatprep.subr.mxu0 0.0
    %1430 = vmatpush1.msra.mxu0 0.0
    %1431 = vmatprep.subr.mxu0 0.0
    %1432 = vmatpush1.msra.mxu0 0.0
    %1433 = vmatprep.subr.mxu0 0.0
    %1434 = vmatpush1.msra.mxu0 0.0
    %1435 = vmatprep.subr.mxu0 0.0
    %1436 = vmatpush1.msra.mxu0 0.0
    %1437 = vmatprep.subr.mxu0 0.0
    %1438 = vmatpush1.msra.mxu0 0.0
    %1439 = vmatprep.subr.mxu0 0.0
    %1440 = vmatpush1.msra.mxu0 0.0
    %1441 = vmatprep.subr.mxu0 0.0
    %1442 = vmatpush1.msra.mxu0 0.0
    %1443 = vmatprep.subr.mxu0 0.0
    %1444 = vmatpush1.msra.mxu0 0.0
    %1445 = vmatprep.subr.mxu0 0.0
    %1446 = vmatpush1.msra.mxu0 0.0
    %1447 = vmatprep.subr.mxu0 0.0
    %1448 = vmatpush1.msra.mxu0 0.0
    %1449 = vmatprep.subr.mxu0 0.0
    %1450 = vmatpush1.msra.mxu0 0.0
    %1451 = vmatprep.subr.mxu0 0.0
    %1452 = vmatpush1.msra.mxu0 0.0
    %1453 = vmatprep.subr.mxu0 0.0
    %1454 = vmatpush1.msra.mxu0 0.0
    %1455 = vmatprep.subr.mxu0 0.0
    %1456 = vmatpush1.msra.mxu0 0.0
    %1457 = vmatprep.mubr.f32.mxu0 0.0
    %1458 = vmatmul.mubr.f32.gmra.mrb[0].mxu0 %v1367
    %v1459 = vpop.f32.mrb[0].mxu0
    %v1460 = vadd.f32 %v1391, %v1459
    %v1461 = vpop.f32.mrb[0].mxu0
    %1462 = vdwg.mxu0
    %v1463 = vlaneseq
    %v1464 = vand.u32 %v1463, 127
    %vm1465 = vcmp.lt.s32.totalorder %v1464, 8
    %v1466 = vsel %vm1465, %v1460, -1e+30
    %1467 = vmax.xlane.f32.xlu0 %v1466
    %v1468 = vpop.xlane.xlu0 %1467
    %v1469 = vsub.f32 %v1466, %v1468
    %v1470 = vmul.f32 %v1469, 1.442695
    %v1471 = vpow.pop %v1470
    %1472 = vadd.xlane.f32.xlu0 %v1471
    %v1473 = vpop.xlane.xlu0 %1472
    %v1474 = vrcp.pop %v1473
    %v1475 = vmul.f32 %v1471, %v1474
    %1476 = vst [vmem:[#allocation18] sm:$0xff] %v1475
    // Predicated region
    $region46: #{tpu_custom_call.1} parent=1 // pred_check
      _
    $region47: #{tpu_custom_call.1} parent=1 // pred_check_branch
      %1478 = sbr.rel (0) target = $region49
    $region48: #{tpu_custom_call.1} parent=1 // pred_region
      %s1480 = ssub.s32 128, 128
      %1481 = vsyncadd [#allocation4], %s1480
      %s1483 = sshll.u32 [#allocation11], 4
      %s1484 = int_to_ptr.vmem [resolvable:$true] %s1483
      %1486 = dma.vmem_to_hbm [thread:$0]  %s1484, 128, %s6, [#allocation4]
    $region49: #{tpu_custom_call.1} parent=1 // pred_fallthru
      _
    // Predicated region
    $region50: #{tpu_custom_call.1} parent=1 // pred_check
      _
    $region51: #{tpu_custom_call.1} parent=1 // pred_check_branch
      %1488 = sbr.rel (0) target = $region53
    $region52: #{tpu_custom_call.1} parent=1 // pred_region
      %s1490 = ssub.s32 128, 128
      %1491 = vsyncadd [#allocation13], %s1490
      %s1493 = sshll.u32 [#allocation12], 4
      %s1494 = int_to_ptr.vmem [resolvable:$true] %s1493
      %1496 = dma.vmem_to_hbm [thread:$0]  %s1494, 128, %s7, [#allocation13]
    $region53: #{tpu_custom_call.1} parent=1 // pred_fallthru
      _
    // Predicated region
    $region54: #{tpu_custom_call.1} parent=1 // pred_check
      _
    $region55: #{tpu_custom_call.1} parent=1 // pred_check_branch
      %1498 = sbr.rel (0) target = $region57
    $region56: #{tpu_custom_call.1} parent=1 // pred_region
      %s1500 = ssub.s32 128, 128
      %1501 = vsyncadd [#allocation13], %s1500
      %s1503 = sshll.u32 [#allocation14], 4
      %s1504 = int_to_ptr.vmem [resolvable:$true] %s1503
      %1506 = dma.vmem_to_hbm [thread:$0]  %s1504, 128, %s8, [#allocation13]
    $region57: #{tpu_custom_call.1} parent=1 // pred_fallthru
      _
    // Predicated region
    $region58: #{tpu_custom_call.1} parent=1 // pred_check
      _
    $region59: #{tpu_custom_call.1} parent=1 // pred_check_branch
      %1508 = sbr.rel (0) target = $region61
    $region60: #{tpu_custom_call.1} parent=1 // pred_region
      %s1510 = ssub.s32 128, 128
      %1511 = vsyncadd [#allocation16], %s1510
      %s1513 = sshll.u32 [#allocation15], 4
      %s1514 = int_to_ptr.vmem [resolvable:$true] %s1513
      %1516 = dma.vmem_to_hbm [thread:$0]  %s1514, 128, %s9, [#allocation16]
    $region61: #{tpu_custom_call.1} parent=1 // pred_fallthru
      _
    // Predicated region
    $region62: #{tpu_custom_call.1} parent=1 // pred_check
      _
    $region63: #{tpu_custom_call.1} parent=1 // pred_check_branch
      %1518 = sbr.rel (0) target = $region65
    $region64: #{tpu_custom_call.1} parent=1 // pred_region
      %s1520 = ssub.s32 128, 128
      %1521 = vsyncadd [#allocation16], %s1520
      %s1523 = sshll.u32 [#allocation17], 4
      %s1524 = int_to_ptr.vmem [resolvable:$true] %s1523
      %1526 = dma.vmem_to_hbm [thread:$0]  %s1524, 128, %s10, [#allocation16]
    $region65: #{tpu_custom_call.1} parent=1 // pred_fallthru
      _
    // Predicated region
    $region66: #{tpu_custom_call.1} parent=1 // pred_check
      _
    $region67: #{tpu_custom_call.1} parent=1 // pred_check_branch
      %1528 = sbr.rel (0) target = $region69
    $region68: #{tpu_custom_call.1} parent=1 // pred_region
      %s1530 = ssub.s32 128, 128
      %1531 = vsyncadd [#allocation19], %s1530
      %s1533 = sshll.u32 [#allocation18], 4
      %s1534 = int_to_ptr.vmem [resolvable:$true] %s1533
      %1536 = dma.vmem_to_hbm [thread:$0]  %s1534, 128, %s11, [#allocation19]
    $region69: #{tpu_custom_call.1} parent=1 // pred_fallthru
      _
    // Predicated region
    $region70: #{tpu_custom_call.1} parent=1 // pred_check
      _
    $region71: #{tpu_custom_call.1} parent=1 // pred_check_branch
      %1538 = sbr.rel (0) target = $region73
    $region72: #{tpu_custom_call.1} parent=1 // pred_region
      %1539 = dma.done [#allocation4], 128
    $region73: #{tpu_custom_call.1} parent=1 // pred_fallthru
      _
    // Predicated region
    $region74: #{tpu_custom_call.1} parent=1 // pred_check
      _
    $region75: #{tpu_custom_call.1} parent=1 // pred_check_branch
      %1541 = sbr.rel (0) target = $region77
    $region76: #{tpu_custom_call.1} parent=1 // pred_region
      %1542 = dma.done [#allocation13], 128
    $region77: #{tpu_custom_call.1} parent=1 // pred_fallthru
      _
    // Predicated region
    $region78: #{tpu_custom_call.1} parent=1 // pred_check
      _
    $region79: #{tpu_custom_call.1} parent=1 // pred_check_branch
      %1544 = sbr.rel (0) target = $region81
    $region80: #{tpu_custom_call.1} parent=1 // pred_region
      %1545 = dma.done [#allocation13], 128
    $region81: #{tpu_custom_call.1} parent=1 // pred_fallthru
      _
    // Predicated region
    $region82: #{tpu_custom_call.1} parent=1 // pred_check
      _
    $region83: #{tpu_custom_call.1} parent=1 // pred_check_branch
      %1547 = sbr.rel (0) target = $region85
    $region84: #{tpu_custom_call.1} parent=1 // pred_region
      %1548 = dma.done [#allocation16], 128
    $region85: #{tpu_custom_call.1} parent=1 // pred_fallthru
      _
    // Predicated region
    $region86: #{tpu_custom_call.1} parent=1 // pred_check
      _
    $region87: #{tpu_custom_call.1} parent=1 // pred_check_branch
      %1550 = sbr.rel (0) target = $region89
    $region88: #{tpu_custom_call.1} parent=1 // pred_region
      %1551 = dma.done [#allocation16], 128
    $region89: #{tpu_custom_call.1} parent=1 // pred_fallthru
      _
    // Predicated region
    $region90: #{tpu_custom_call.1} parent=1 // pred_check
      _
    $region91: #{tpu_custom_call.1} parent=1 // pred_check_branch
      %1553 = sbr.rel (0) target = $region93
    $region92: #{tpu_custom_call.1} parent=1 // pred_region
      %1554 = dma.done [#allocation19], 128
    $region93: #{tpu_custom_call.1} parent=1 // pred_fallthru
      _
    %1555 = vsyncpa [#allocation3], 1
    %1556 = vsyncpa [#allocation6], 1
    %1557 = vsyncpa [#allocation9], 1
    %1558 = vsyncpa [#allocation4], 1
    %1559 = vsyncpa [#allocation13], 1
    %1560 = vsyncpa [#allocation16], 1
    %1561 = vsyncpa [#allocation19], 1

</llo_original>
